<compile_context>
chip_gen: v7x
topology: tpu7x:2x2x1
jax: 0.10.0
libtpu: 0.0.40
codegen_flags: <defaults>
</compile_context>

<pallas_src>
import jax
import jax.numpy as jnp
from jax.experimental import pallas as pl
from jax.experimental.pallas import tpu as pltpu

LENGTH = 80          # Linear(74*4, 1) hard-wires length = 80 (74 = length - 6)
KH = 4               # conv kernel height
POOL = 4             # maxpool kernel (4,4), stride 1
N_CH = 4             # conv output channels
N_BASE = 4           # A/C/G/T width
BATCH_TILE = 1024    # max samples (lanes) per grid step (multiple of 128)


def _round_up(x, m):
    return (x + m - 1) // m * m


def homo_frac_kernel(x_ref, cw_ref, cb_ref, lb_ref, lw_ref, out_ref):
    # x_ref  : (4, L, TB)  VMEM bf16  (base, seq, batch-on-lanes)
    # cw_ref : (4, 4)      SMEM f32   conv weight [out_c, kh]
    # cb_ref : (4,)        SMEM f32   conv bias
    # lb_ref : (1,)        SMEM f32   effective linear bias (conv bias folded in)
    # lw_ref : (4, L, 1)   VMEM f32   linear weight rows, zero-padded past Hp=74
    # out_ref: (1, 1, TB)  VMEM f32   lane-dense sigmoid outputs
    L = x_ref.shape[1]
    x = x_ref[...].astype(jnp.float32)                       # cast after load

    # 4 shifted copies of each base row, built with XLU sublane rolls so every
    # operand stays (8,128)-aligned.  Circular wrap only pollutes rows >= 77,
    # which are later multiplied by the zero-padded linear weight.
    sh = [[x[b]] + [pltpu.roll(x[b], shift=L - kh, axis=0) for kh in range(1, KH)]
          for b in range(N_BASE)]                            # sh[b][kh]: (L, TB)

    lin_acc = None
    for c in range(N_CH):
        w = [cw_ref[c, k] for k in range(KH)]                # SMEM scalars

        # ---- Conv2d(1,4,(4,1)) for channel c, then max over the 4 bases ----
        m = None
        for b in range(N_BASE):
            conv_b = sh[b][0] * w[0]
            for kh in range(1, KH):
                conv_b = conv_b + sh[b][kh] * w[kh]          # (L, TB)
            m = conv_b if m is None else jnp.maximum(m, conv_b)

        # ---- MaxPool over 4 consecutive positions (stride 1), via rolls ----
        pooled = m
        for dh in range(1, POOL):
            pooled = jnp.maximum(pooled, pltpu.roll(m, shift=L - dh, axis=0))

        # conv bias + ReLU folded into the max:  relu(z+b) = max(z,-b) + b,
        # the "+b" term is pre-folded into lb_ref on the host.
        act = jnp.maximum(pooled, -cb_ref[c])                # (L, TB)

        # ---- Linear(296,1): weight this channel's pooled features ----
        contrib = act * lw_ref[c]                            # (L,1) lane-splat; rows >=74 are zero
        lin_acc = contrib if lin_acc is None else lin_acc + contrib

    # single sublane reduction over the feature axis, then bias + stable sigmoid
    y = jnp.sum(lin_acc, axis=0, keepdims=True) + lb_ref[0]  # (1, TB)
    z = jnp.exp(-jnp.abs(y))
    out_ref[0, :, :] = jnp.where(y >= 0, 1.0 / (1.0 + z), z / (1.0 + z))


def _homo_frac_pre_impl(x, conv_w, conv_b, lin_w, lin_b):
    """x: (B, L, 4) one-hot-ish DNA; returns (B,) float32 (matches torch module).

    The batch-on-lanes relayout is stored in bf16 (exact for one-hot input).
    conv_w is (out_c=4, kh=4) (torch (4,1,4,1) squeezed), lin_w is (1, 296).
    """
    B, L, W = x.shape
    assert W == N_BASE, "input width must be 4 (A/C/G/T one-hot)"
    Ho = L - (KH - 1)                  # 77
    Hp = Ho - (POOL - 1)               # 74
    assert lin_w.shape[-1] == N_CH * Hp, (
        "Linear weight width must be 4*(length-6); module hard-wires length=80")

    # batch tile: multiple of 128 lanes; derived from cdiv(B,2) so B>128 gives
    # >=2 grid steps (both v7x TensorCores busy), capped at BATCH_TILE.
    tb = min(BATCH_TILE, max(128, _round_up(pl.cdiv(B, 2), 128)))
    b_pad = _round_up(B, tb)
    n_tiles = b_pad // tb

    # one-time narrow (bf16) relayout to batch-on-lanes (4, L, B_pad)
    x_t = jnp.transpose(x.astype(jnp.bfloat16), (2, 1, 0))   # (4, L, B)
    if b_pad != B:
        x_t = jnp.pad(x_t, ((0, 0), (0, 0), (0, b_pad - B)))

    # NCHW flatten order => weight for (channel c, position h) is lin_w[0, c*Hp+h]
    lw74 = lin_w.reshape(N_CH, Hp).astype(jnp.float32)
    lw = jnp.pad(lw74, ((0, 0), (0, L - Hp)))[..., None]     # (4, L, 1), tail rows zero
    # fold the "+cb" left over from relu(z+cb)=max(z,-cb)+cb into the linear bias
    lb_eff = (lin_b.astype(jnp.float32).reshape(-1)[:1]
              + jnp.sum(conv_b.astype(jnp.float32) * jnp.sum(lw74, axis=1)))

    out = pl.pallas_call(
        homo_frac_kernel,
        out_shape=jax.ShapeDtypeStruct((n_tiles, 1, tb), jnp.float32),
        grid=(n_tiles,),
        in_specs=[
            pl.BlockSpec((N_BASE, L, tb), lambda i: (0, 0, i)),          # x tile (bf16)
            pl.BlockSpec(memory_space=pltpu.MemorySpace.SMEM),           # conv w
            pl.BlockSpec(memory_space=pltpu.MemorySpace.SMEM),           # conv b
            pl.BlockSpec(memory_space=pltpu.MemorySpace.SMEM),           # eff. lin b
            pl.BlockSpec(memory_space=pltpu.MemorySpace.VMEM),           # lin w (padded)
        ],
        out_specs=pl.BlockSpec((1, 1, tb), lambda i: (i, 0, 0)),
        compiler_params=pltpu.CompilerParams(
            dimension_semantics=("parallel",),    # shard batch grid across v7x's 2 TCs
            vmem_limit_bytes=48 * 1024 * 1024,    # headroom for TB=1024 intermediates
        ),
    )(x_t, conv_w.astype(jnp.float32), conv_b.astype(jnp.float32), lb_eff, lw)

    return out.reshape(b_pad)[:B]


homo_frac_pre = jax.jit(_homo_frac_pre_impl)


# ---------------- pure-JAX reference (for correctness check) ----------------
def reference_forward(x, conv_w, conv_b, lin_w, lin_b):
    B, L, _ = x.shape
    Ho = L - 3
    Hp = Ho - 3
    # conv (B, 4, Ho, 4), NCHW
    conv = jnp.stack(
        [sum(x[:, kh:kh + Ho, :] * conv_w[c, kh] for kh in range(4)) + conv_b[c]
         for c in range(4)],
        axis=1)
    conv = jnp.maximum(conv, 0.0)
    # maxpool (4,4) stride 1 -> (B, 4, Hp, 1)
    m = jnp.max(conv, axis=3)                                   # over width (bases)
    pooled = m[:, :, 0:Hp]
    for dh in range(1, 4):
        pooled = jnp.maximum(pooled, m[:, :, dh:dh + Hp])
    feat = pooled.reshape(B, 4 * Hp)                            # NCHW flatten
    y = jax.nn.sigmoid(feat @ lin_w.T + lin_b)                  # (B, 1)
    return y.reshape(B)


if __name__ == "__main__":
    key = jax.random.PRNGKey(0)
    k_idx, k_cw, k_cb, k_lw, k_lb = jax.random.split(key, 5)

    B = 2
    # one-hot DNA input (exact in bf16)
    bases = jax.random.randint(k_idx, (B, LENGTH), 0, 4)
    x = jax.nn.one_hot(bases, 4, dtype=jnp.float32)             # (B, 80, 4)

    # Conv2d(1, 4, (4,1)) weight: torch shape (4,1,4,1) -> (out_c, kh)
    # kaiming_uniform_(nonlinearity='relu'): bound = sqrt(6 / fan_in), fan_in = 4
    bound = (6.0 / 4.0) ** 0.5
    conv_w = jax.random.uniform(k_cw, (N_CH, KH), minval=-bound, maxval=bound,
                                dtype=jnp.float32)
    # module initializes conv bias to zero; use small nonzero values here so
    # the bias-folding path is exercised (both kernel and reference use them)
    conv_b = 0.05 * jax.random.normal(k_cb, (N_CH,), dtype=jnp.float32)

    # Linear(296, 1): weight ~ N(0, 0.01), bias small
    lin_w = 0.01 * jax.random.normal(k_lw, (1, 74 * N_CH), dtype=jnp.float32)
    lin_b = jax.random.uniform(k_lb, (1,), minval=-0.05, maxval=0.05,
                               dtype=jnp.float32)

    out = homo_frac_pre(x, conv_w, conv_b, lin_w, lin_b)
    out = jax.block_until_ready(out)

    ref = reference_forward(x, conv_w, conv_b, lin_w, lin_b)
    assert out.shape == (B,), out.shape
    assert jnp.allclose(out, ref, atol=1e-5, rtol=1e-5), (out, ref)

    print("KERNEL_OK")
</pallas_src>

<mosaic_0001>
module attributes {stable_mosaic.version = 11 : i64} {
  func.func @homo_frac_kernel(%arg0: i32, %arg1: memref<4x80x128xbf16, #tpu.memory_space<vmem>>, %arg2: memref<4x4xf32, #tpu.memory_space<smem>>, %arg3: memref<4xf32, #tpu.memory_space<smem>>, %arg4: memref<1xf32, #tpu.memory_space<smem>>, %arg5: memref<4x80x1xf32, #tpu.memory_space<vmem>>, %arg6: memref<1x1x128xf32, #tpu.memory_space<vmem>>) attributes {dimension_semantics = [#tpu.dimension_semantics<parallel>], iteration_bounds = array<i64: 1>, scalar_prefetch = 0 : i64, scratch_operands = 0 : i64, tpu.core_type = #tpu.core_type<tc>, window_params = [{transform_indices = @transform_0, window_bounds = array<i64: 4, 80, 128>}, {transform_indices = @transform_1, window_bounds = array<i64: 4, 4>}, {transform_indices = @transform_2, window_bounds = array<i64: 4>}, {transform_indices = @transform_3, window_bounds = array<i64: 1>}, {pipeline_mode = #tpu.pipeline_mode<synchronous>, transform_indices = @transform_4, window_bounds = array<i64: 4, 80, 1>}, {transform_indices = @transform_5, window_bounds = array<i64: 1, 1, 128>}]} {
    %c0 = arith.constant 0 : index
    %c0_0 = arith.constant 0 : index
    %c0_1 = arith.constant 0 : index
    %0 = vector.load %arg1[%c0, %c0_0, %c0_1] : memref<4x80x128xbf16, #tpu.memory_space<vmem>>, vector<4x80x128xbf16>
    %1 = arith.extf %0 : vector<4x80x128xbf16> to vector<4x80x128xf32>
    %2 = vector.extract_strided_slice %1 {offsets = [0, 0, 0], sizes = [1, 80, 128], strides = [1, 1, 1]} : vector<4x80x128xf32> to vector<1x80x128xf32>
    %3 = vector.shape_cast %2 : vector<1x80x128xf32> to vector<80x128xf32>
    %4 = vector.extract_strided_slice %1 {offsets = [0, 0, 0], sizes = [1, 80, 128], strides = [1, 1, 1]} : vector<4x80x128xf32> to vector<1x80x128xf32>
    %5 = vector.shape_cast %4 : vector<1x80x128xf32> to vector<80x128xf32>
    %c79_i32 = arith.constant 79 : i32
    %6 = tpu.dynamic_rotate %5 by %c79_i32 dim 0 : vector<80x128xf32>, i32 -> vector<80x128xf32>
    %7 = vector.extract_strided_slice %1 {offsets = [0, 0, 0], sizes = [1, 80, 128], strides = [1, 1, 1]} : vector<4x80x128xf32> to vector<1x80x128xf32>
    %8 = vector.shape_cast %7 : vector<1x80x128xf32> to vector<80x128xf32>
    %c78_i32 = arith.constant 78 : i32
    %9 = tpu.dynamic_rotate %8 by %c78_i32 dim 0 : vector<80x128xf32>, i32 -> vector<80x128xf32>
    %10 = vector.extract_strided_slice %1 {offsets = [0, 0, 0], sizes = [1, 80, 128], strides = [1, 1, 1]} : vector<4x80x128xf32> to vector<1x80x128xf32>
    %11 = vector.shape_cast %10 : vector<1x80x128xf32> to vector<80x128xf32>
    %c77_i32 = arith.constant 77 : i32
    %12 = tpu.dynamic_rotate %11 by %c77_i32 dim 0 : vector<80x128xf32>, i32 -> vector<80x128xf32>
    %13 = vector.extract_strided_slice %1 {offsets = [1, 0, 0], sizes = [1, 80, 128], strides = [1, 1, 1]} : vector<4x80x128xf32> to vector<1x80x128xf32>
    %14 = vector.shape_cast %13 : vector<1x80x128xf32> to vector<80x128xf32>
    %15 = vector.extract_strided_slice %1 {offsets = [1, 0, 0], sizes = [1, 80, 128], strides = [1, 1, 1]} : vector<4x80x128xf32> to vector<1x80x128xf32>
    %16 = vector.shape_cast %15 : vector<1x80x128xf32> to vector<80x128xf32>
    %c79_i32_2 = arith.constant 79 : i32
    %17 = tpu.dynamic_rotate %16 by %c79_i32_2 dim 0 : vector<80x128xf32>, i32 -> vector<80x128xf32>
    %18 = vector.extract_strided_slice %1 {offsets = [1, 0, 0], sizes = [1, 80, 128], strides = [1, 1, 1]} : vector<4x80x128xf32> to vector<1x80x128xf32>
    %19 = vector.shape_cast %18 : vector<1x80x128xf32> to vector<80x128xf32>
    %c78_i32_3 = arith.constant 78 : i32
    %20 = tpu.dynamic_rotate %19 by %c78_i32_3 dim 0 : vector<80x128xf32>, i32 -> vector<80x128xf32>
    %21 = vector.extract_strided_slice %1 {offsets = [1, 0, 0], sizes = [1, 80, 128], strides = [1, 1, 1]} : vector<4x80x128xf32> to vector<1x80x128xf32>
    %22 = vector.shape_cast %21 : vector<1x80x128xf32> to vector<80x128xf32>
    %c77_i32_4 = arith.constant 77 : i32
    %23 = tpu.dynamic_rotate %22 by %c77_i32_4 dim 0 : vector<80x128xf32>, i32 -> vector<80x128xf32>
    %24 = vector.extract_strided_slice %1 {offsets = [2, 0, 0], sizes = [1, 80, 128], strides = [1, 1, 1]} : vector<4x80x128xf32> to vector<1x80x128xf32>
    %25 = vector.shape_cast %24 : vector<1x80x128xf32> to vector<80x128xf32>
    %26 = vector.extract_strided_slice %1 {offsets = [2, 0, 0], sizes = [1, 80, 128], strides = [1, 1, 1]} : vector<4x80x128xf32> to vector<1x80x128xf32>
    %27 = vector.shape_cast %26 : vector<1x80x128xf32> to vector<80x128xf32>
    %c79_i32_5 = arith.constant 79 : i32
    %28 = tpu.dynamic_rotate %27 by %c79_i32_5 dim 0 : vector<80x128xf32>, i32 -> vector<80x128xf32>
    %29 = vector.extract_strided_slice %1 {offsets = [2, 0, 0], sizes = [1, 80, 128], strides = [1, 1, 1]} : vector<4x80x128xf32> to vector<1x80x128xf32>
    %30 = vector.shape_cast %29 : vector<1x80x128xf32> to vector<80x128xf32>
    %c78_i32_6 = arith.constant 78 : i32
    %31 = tpu.dynamic_rotate %30 by %c78_i32_6 dim 0 : vector<80x128xf32>, i32 -> vector<80x128xf32>
    %32 = vector.extract_strided_slice %1 {offsets = [2, 0, 0], sizes = [1, 80, 128], strides = [1, 1, 1]} : vector<4x80x128xf32> to vector<1x80x128xf32>
    %33 = vector.shape_cast %32 : vector<1x80x128xf32> to vector<80x128xf32>
    %c77_i32_7 = arith.constant 77 : i32
    %34 = tpu.dynamic_rotate %33 by %c77_i32_7 dim 0 : vector<80x128xf32>, i32 -> vector<80x128xf32>
    %35 = vector.extract_strided_slice %1 {offsets = [3, 0, 0], sizes = [1, 80, 128], strides = [1, 1, 1]} : vector<4x80x128xf32> to vector<1x80x128xf32>
    %36 = vector.shape_cast %35 : vector<1x80x128xf32> to vector<80x128xf32>
    %37 = vector.extract_strided_slice %1 {offsets = [3, 0, 0], sizes = [1, 80, 128], strides = [1, 1, 1]} : vector<4x80x128xf32> to vector<1x80x128xf32>
    %38 = vector.shape_cast %37 : vector<1x80x128xf32> to vector<80x128xf32>
    %c79_i32_8 = arith.constant 79 : i32
    %39 = tpu.dynamic_rotate %38 by %c79_i32_8 dim 0 : vector<80x128xf32>, i32 -> vector<80x128xf32>
    %40 = vector.extract_strided_slice %1 {offsets = [3, 0, 0], sizes = [1, 80, 128], strides = [1, 1, 1]} : vector<4x80x128xf32> to vector<1x80x128xf32>
    %41 = vector.shape_cast %40 : vector<1x80x128xf32> to vector<80x128xf32>
    %c78_i32_9 = arith.constant 78 : i32
    %42 = tpu.dynamic_rotate %41 by %c78_i32_9 dim 0 : vector<80x128xf32>, i32 -> vector<80x128xf32>
    %43 = vector.extract_strided_slice %1 {offsets = [3, 0, 0], sizes = [1, 80, 128], strides = [1, 1, 1]} : vector<4x80x128xf32> to vector<1x80x128xf32>
    %44 = vector.shape_cast %43 : vector<1x80x128xf32> to vector<80x128xf32>
    %c77_i32_10 = arith.constant 77 : i32
    %45 = tpu.dynamic_rotate %44 by %c77_i32_10 dim 0 : vector<80x128xf32>, i32 -> vector<80x128xf32>
    %c0_11 = arith.constant 0 : index
    %c0_12 = arith.constant 0 : index
    %46 = memref.load %arg2[%c0_11, %c0_12] : memref<4x4xf32, #tpu.memory_space<smem>>
    %c0_13 = arith.constant 0 : index
    %c1 = arith.constant 1 : index
    %47 = memref.load %arg2[%c0_13, %c1] : memref<4x4xf32, #tpu.memory_space<smem>>
    %c0_14 = arith.constant 0 : index
    %c2 = arith.constant 2 : index
    %48 = memref.load %arg2[%c0_14, %c2] : memref<4x4xf32, #tpu.memory_space<smem>>
    %c0_15 = arith.constant 0 : index
    %c3 = arith.constant 3 : index
    %49 = memref.load %arg2[%c0_15, %c3] : memref<4x4xf32, #tpu.memory_space<smem>>
    %50 = vector.broadcast %46 : f32 to vector<80x128xf32>
    %51 = arith.mulf %3, %50 : vector<80x128xf32>
    %52 = vector.broadcast %47 : f32 to vector<80x128xf32>
    %53 = arith.mulf %6, %52 : vector<80x128xf32>
    %54 = arith.addf %51, %53 : vector<80x128xf32>
    %55 = vector.broadcast %48 : f32 to vector<80x128xf32>
    %56 = arith.mulf %9, %55 : vector<80x128xf32>
    %57 = arith.addf %54, %56 : vector<80x128xf32>
    %58 = vector.broadcast %49 : f32 to vector<80x128xf32>
    %59 = arith.mulf %12, %58 : vector<80x128xf32>
    %60 = arith.addf %57, %59 : vector<80x128xf32>
    %61 = vector.broadcast %46 : f32 to vector<80x128xf32>
    %62 = arith.mulf %14, %61 : vector<80x128xf32>
    %63 = vector.broadcast %47 : f32 to vector<80x128xf32>
    %64 = arith.mulf %17, %63 : vector<80x128xf32>
    %65 = arith.addf %62, %64 : vector<80x128xf32>
    %66 = vector.broadcast %48 : f32 to vector<80x128xf32>
    %67 = arith.mulf %20, %66 : vector<80x128xf32>
    %68 = arith.addf %65, %67 : vector<80x128xf32>
    %69 = vector.broadcast %49 : f32 to vector<80x128xf32>
    %70 = arith.mulf %23, %69 : vector<80x128xf32>
    %71 = arith.addf %68, %70 : vector<80x128xf32>
    %72 = arith.maximumf %60, %71 : vector<80x128xf32>
    %73 = vector.broadcast %46 : f32 to vector<80x128xf32>
    %74 = arith.mulf %25, %73 : vector<80x128xf32>
    %75 = vector.broadcast %47 : f32 to vector<80x128xf32>
    %76 = arith.mulf %28, %75 : vector<80x128xf32>
    %77 = arith.addf %74, %76 : vector<80x128xf32>
    %78 = vector.broadcast %48 : f32 to vector<80x128xf32>
    %79 = arith.mulf %31, %78 : vector<80x128xf32>
    %80 = arith.addf %77, %79 : vector<80x128xf32>
    %81 = vector.broadcast %49 : f32 to vector<80x128xf32>
    %82 = arith.mulf %34, %81 : vector<80x128xf32>
    %83 = arith.addf %80, %82 : vector<80x128xf32>
    %84 = arith.maximumf %72, %83 : vector<80x128xf32>
    %85 = vector.broadcast %46 : f32 to vector<80x128xf32>
    %86 = arith.mulf %36, %85 : vector<80x128xf32>
    %87 = vector.broadcast %47 : f32 to vector<80x128xf32>
    %88 = arith.mulf %39, %87 : vector<80x128xf32>
    %89 = arith.addf %86, %88 : vector<80x128xf32>
    %90 = vector.broadcast %48 : f32 to vector<80x128xf32>
    %91 = arith.mulf %42, %90 : vector<80x128xf32>
    %92 = arith.addf %89, %91 : vector<80x128xf32>
    %93 = vector.broadcast %49 : f32 to vector<80x128xf32>
    %94 = arith.mulf %45, %93 : vector<80x128xf32>
    %95 = arith.addf %92, %94 : vector<80x128xf32>
    %96 = arith.maximumf %84, %95 : vector<80x128xf32>
    %c79_i32_16 = arith.constant 79 : i32
    %97 = tpu.dynamic_rotate %96 by %c79_i32_16 dim 0 : vector<80x128xf32>, i32 -> vector<80x128xf32>
    %98 = arith.maximumf %96, %97 : vector<80x128xf32>
    %c78_i32_17 = arith.constant 78 : i32
    %99 = tpu.dynamic_rotate %96 by %c78_i32_17 dim 0 : vector<80x128xf32>, i32 -> vector<80x128xf32>
    %100 = arith.maximumf %98, %99 : vector<80x128xf32>
    %c77_i32_18 = arith.constant 77 : i32
    %101 = tpu.dynamic_rotate %96 by %c77_i32_18 dim 0 : vector<80x128xf32>, i32 -> vector<80x128xf32>
    %102 = arith.maximumf %100, %101 : vector<80x128xf32>
    %c0_19 = arith.constant 0 : index
    %103 = memref.load %arg3[%c0_19] : memref<4xf32, #tpu.memory_space<smem>>
    %cst = arith.constant 0.000000e+00 : f32
    %104 = arith.subf %cst, %103 : f32
    %105 = vector.broadcast %104 : f32 to vector<80x128xf32>
    %106 = arith.maximumf %102, %105 : vector<80x128xf32>
    %c0_20 = arith.constant 0 : index
    %c0_21 = arith.constant 0 : index
    %c0_22 = arith.constant 0 : index
    %107 = vector.load %arg5[%c0_20, %c0_21, %c0_22] : memref<4x80x1xf32, #tpu.memory_space<vmem>>, vector<1x80x1xf32>
    %108 = vector.shape_cast %107 : vector<1x80x1xf32> to vector<80x1xf32>
    %109 = vector.broadcast %108 : vector<80x1xf32> to vector<80x128xf32>
    %110 = arith.mulf %106, %109 : vector<80x128xf32>
    %c1_23 = arith.constant 1 : index
    %c0_24 = arith.constant 0 : index
    %111 = memref.load %arg2[%c1_23, %c0_24] : memref<4x4xf32, #tpu.memory_space<smem>>
    %c1_25 = arith.constant 1 : index
    %c1_26 = arith.constant 1 : index
    %112 = memref.load %arg2[%c1_25, %c1_26] : memref<4x4xf32, #tpu.memory_space<smem>>
    %c1_27 = arith.constant 1 : index
    %c2_28 = arith.constant 2 : index
    %113 = memref.load %arg2[%c1_27, %c2_28] : memref<4x4xf32, #tpu.memory_space<smem>>
    %c1_29 = arith.constant 1 : index
    %c3_30 = arith.constant 3 : index
    %114 = memref.load %arg2[%c1_29, %c3_30] : memref<4x4xf32, #tpu.memory_space<smem>>
    %115 = vector.broadcast %111 : f32 to vector<80x128xf32>
    %116 = arith.mulf %3, %115 : vector<80x128xf32>
    %117 = vector.broadcast %112 : f32 to vector<80x128xf32>
    %118 = arith.mulf %6, %117 : vector<80x128xf32>
    %119 = arith.addf %116, %118 : vector<80x128xf32>
    %120 = vector.broadcast %113 : f32 to vector<80x128xf32>
    %121 = arith.mulf %9, %120 : vector<80x128xf32>
    %122 = arith.addf %119, %121 : vector<80x128xf32>
    %123 = vector.broadcast %114 : f32 to vector<80x128xf32>
    %124 = arith.mulf %12, %123 : vector<80x128xf32>
    %125 = arith.addf %122, %124 : vector<80x128xf32>
    %126 = vector.broadcast %111 : f32 to vector<80x128xf32>
    %127 = arith.mulf %14, %126 : vector<80x128xf32>
    %128 = vector.broadcast %112 : f32 to vector<80x128xf32>
    %129 = arith.mulf %17, %128 : vector<80x128xf32>
    %130 = arith.addf %127, %129 : vector<80x128xf32>
    %131 = vector.broadcast %113 : f32 to vector<80x128xf32>
    %132 = arith.mulf %20, %131 : vector<80x128xf32>
    %133 = arith.addf %130, %132 : vector<80x128xf32>
    %134 = vector.broadcast %114 : f32 to vector<80x128xf32>
    %135 = arith.mulf %23, %134 : vector<80x128xf32>
    %136 = arith.addf %133, %135 : vector<80x128xf32>
    %137 = arith.maximumf %125, %136 : vector<80x128xf32>
    %138 = vector.broadcast %111 : f32 to vector<80x128xf32>
    %139 = arith.mulf %25, %138 : vector<80x128xf32>
    %140 = vector.broadcast %112 : f32 to vector<80x128xf32>
    %141 = arith.mulf %28, %140 : vector<80x128xf32>
    %142 = arith.addf %139, %141 : vector<80x128xf32>
    %143 = vector.broadcast %113 : f32 to vector<80x128xf32>
    %144 = arith.mulf %31, %143 : vector<80x128xf32>
    %145 = arith.addf %142, %144 : vector<80x128xf32>
    %146 = vector.broadcast %114 : f32 to vector<80x128xf32>
    %147 = arith.mulf %34, %146 : vector<80x128xf32>
    %148 = arith.addf %145, %147 : vector<80x128xf32>
    %149 = arith.maximumf %137, %148 : vector<80x128xf32>
    %150 = vector.broadcast %111 : f32 to vector<80x128xf32>
    %151 = arith.mulf %36, %150 : vector<80x128xf32>
    %152 = vector.broadcast %112 : f32 to vector<80x128xf32>
    %153 = arith.mulf %39, %152 : vector<80x128xf32>
    %154 = arith.addf %151, %153 : vector<80x128xf32>
    %155 = vector.broadcast %113 : f32 to vector<80x128xf32>
    %156 = arith.mulf %42, %155 : vector<80x128xf32>
    %157 = arith.addf %154, %156 : vector<80x128xf32>
    %158 = vector.broadcast %114 : f32 to vector<80x128xf32>
    %159 = arith.mulf %45, %158 : vector<80x128xf32>
    %160 = arith.addf %157, %159 : vector<80x128xf32>
    %161 = arith.maximumf %149, %160 : vector<80x128xf32>
    %c79_i32_31 = arith.constant 79 : i32
    %162 = tpu.dynamic_rotate %161 by %c79_i32_31 dim 0 : vector<80x128xf32>, i32 -> vector<80x128xf32>
    %163 = arith.maximumf %161, %162 : vector<80x128xf32>
    %c78_i32_32 = arith.constant 78 : i32
    %164 = tpu.dynamic_rotate %161 by %c78_i32_32 dim 0 : vector<80x128xf32>, i32 -> vector<80x128xf32>
    %165 = arith.maximumf %163, %164 : vector<80x128xf32>
    %c77_i32_33 = arith.constant 77 : i32
    %166 = tpu.dynamic_rotate %161 by %c77_i32_33 dim 0 : vector<80x128xf32>, i32 -> vector<80x128xf32>
    %167 = arith.maximumf %165, %166 : vector<80x128xf32>
    %c1_34 = arith.constant 1 : index
    %168 = memref.load %arg3[%c1_34] : memref<4xf32, #tpu.memory_space<smem>>
    %cst_35 = arith.constant 0.000000e+00 : f32
    %169 = arith.subf %cst_35, %168 : f32
    %170 = vector.broadcast %169 : f32 to vector<80x128xf32>
    %171 = arith.maximumf %167, %170 : vector<80x128xf32>
    %c1_36 = arith.constant 1 : index
    %c0_37 = arith.constant 0 : index
    %c0_38 = arith.constant 0 : index
    %172 = vector.load %arg5[%c1_36, %c0_37, %c0_38] : memref<4x80x1xf32, #tpu.memory_space<vmem>>, vector<1x80x1xf32>
    %173 = vector.shape_cast %172 : vector<1x80x1xf32> to vector<80x1xf32>
    %174 = vector.broadcast %173 : vector<80x1xf32> to vector<80x128xf32>
    %175 = arith.mulf %171, %174 : vector<80x128xf32>
    %176 = arith.addf %110, %175 : vector<80x128xf32>
    %c2_39 = arith.constant 2 : index
    %c0_40 = arith.constant 0 : index
    %177 = memref.load %arg2[%c2_39, %c0_40] : memref<4x4xf32, #tpu.memory_space<smem>>
    %c2_41 = arith.constant 2 : index
    %c1_42 = arith.constant 1 : index
    %178 = memref.load %arg2[%c2_41, %c1_42] : memref<4x4xf32, #tpu.memory_space<smem>>
    %c2_43 = arith.constant 2 : index
    %c2_44 = arith.constant 2 : index
    %179 = memref.load %arg2[%c2_43, %c2_44] : memref<4x4xf32, #tpu.memory_space<smem>>
    %c2_45 = arith.constant 2 : index
    %c3_46 = arith.constant 3 : index
    %180 = memref.load %arg2[%c2_45, %c3_46] : memref<4x4xf32, #tpu.memory_space<smem>>
    %181 = vector.broadcast %177 : f32 to vector<80x128xf32>
    %182 = arith.mulf %3, %181 : vector<80x128xf32>
    %183 = vector.broadcast %178 : f32 to vector<80x128xf32>
    %184 = arith.mulf %6, %183 : vector<80x128xf32>
    %185 = arith.addf %182, %184 : vector<80x128xf32>
    %186 = vector.broadcast %179 : f32 to vector<80x128xf32>
    %187 = arith.mulf %9, %186 : vector<80x128xf32>
    %188 = arith.addf %185, %187 : vector<80x128xf32>
    %189 = vector.broadcast %180 : f32 to vector<80x128xf32>
    %190 = arith.mulf %12, %189 : vector<80x128xf32>
    %191 = arith.addf %188, %190 : vector<80x128xf32>
    %192 = vector.broadcast %177 : f32 to vector<80x128xf32>
    %193 = arith.mulf %14, %192 : vector<80x128xf32>
    %194 = vector.broadcast %178 : f32 to vector<80x128xf32>
    %195 = arith.mulf %17, %194 : vector<80x128xf32>
    %196 = arith.addf %193, %195 : vector<80x128xf32>
    %197 = vector.broadcast %179 : f32 to vector<80x128xf32>
    %198 = arith.mulf %20, %197 : vector<80x128xf32>
    %199 = arith.addf %196, %198 : vector<80x128xf32>
    %200 = vector.broadcast %180 : f32 to vector<80x128xf32>
    %201 = arith.mulf %23, %200 : vector<80x128xf32>
    %202 = arith.addf %199, %201 : vector<80x128xf32>
    %203 = arith.maximumf %191, %202 : vector<80x128xf32>
    %204 = vector.broadcast %177 : f32 to vector<80x128xf32>
    %205 = arith.mulf %25, %204 : vector<80x128xf32>
    %206 = vector.broadcast %178 : f32 to vector<80x128xf32>
    %207 = arith.mulf %28, %206 : vector<80x128xf32>
    %208 = arith.addf %205, %207 : vector<80x128xf32>
    %209 = vector.broadcast %179 : f32 to vector<80x128xf32>
    %210 = arith.mulf %31, %209 : vector<80x128xf32>
    %211 = arith.addf %208, %210 : vector<80x128xf32>
    %212 = vector.broadcast %180 : f32 to vector<80x128xf32>
    %213 = arith.mulf %34, %212 : vector<80x128xf32>
    %214 = arith.addf %211, %213 : vector<80x128xf32>
    %215 = arith.maximumf %203, %214 : vector<80x128xf32>
    %216 = vector.broadcast %177 : f32 to vector<80x128xf32>
    %217 = arith.mulf %36, %216 : vector<80x128xf32>
    %218 = vector.broadcast %178 : f32 to vector<80x128xf32>
    %219 = arith.mulf %39, %218 : vector<80x128xf32>
    %220 = arith.addf %217, %219 : vector<80x128xf32>
    %221 = vector.broadcast %179 : f32 to vector<80x128xf32>
    %222 = arith.mulf %42, %221 : vector<80x128xf32>
    %223 = arith.addf %220, %222 : vector<80x128xf32>
    %224 = vector.broadcast %180 : f32 to vector<80x128xf32>
    %225 = arith.mulf %45, %224 : vector<80x128xf32>
    %226 = arith.addf %223, %225 : vector<80x128xf32>
    %227 = arith.maximumf %215, %226 : vector<80x128xf32>
    %c79_i32_47 = arith.constant 79 : i32
    %228 = tpu.dynamic_rotate %227 by %c79_i32_47 dim 0 : vector<80x128xf32>, i32 -> vector<80x128xf32>
    %229 = arith.maximumf %227, %228 : vector<80x128xf32>
    %c78_i32_48 = arith.constant 78 : i32
    %230 = tpu.dynamic_rotate %227 by %c78_i32_48 dim 0 : vector<80x128xf32>, i32 -> vector<80x128xf32>
    %231 = arith.maximumf %229, %230 : vector<80x128xf32>
    %c77_i32_49 = arith.constant 77 : i32
    %232 = tpu.dynamic_rotate %227 by %c77_i32_49 dim 0 : vector<80x128xf32>, i32 -> vector<80x128xf32>
    %233 = arith.maximumf %231, %232 : vector<80x128xf32>
    %c2_50 = arith.constant 2 : index
    %234 = memref.load %arg3[%c2_50] : memref<4xf32, #tpu.memory_space<smem>>
    %cst_51 = arith.constant 0.000000e+00 : f32
    %235 = arith.subf %cst_51, %234 : f32
    %236 = vector.broadcast %235 : f32 to vector<80x128xf32>
    %237 = arith.maximumf %233, %236 : vector<80x128xf32>
    %c2_52 = arith.constant 2 : index
    %c0_53 = arith.constant 0 : index
    %c0_54 = arith.constant 0 : index
    %238 = vector.load %arg5[%c2_52, %c0_53, %c0_54] : memref<4x80x1xf32, #tpu.memory_space<vmem>>, vector<1x80x1xf32>
    %239 = vector.shape_cast %238 : vector<1x80x1xf32> to vector<80x1xf32>
    %240 = vector.broadcast %239 : vector<80x1xf32> to vector<80x128xf32>
    %241 = arith.mulf %237, %240 : vector<80x128xf32>
    %242 = arith.addf %176, %241 : vector<80x128xf32>
    %c3_55 = arith.constant 3 : index
    %c0_56 = arith.constant 0 : index
    %243 = memref.load %arg2[%c3_55, %c0_56] : memref<4x4xf32, #tpu.memory_space<smem>>
    %c3_57 = arith.constant 3 : index
    %c1_58 = arith.constant 1 : index
    %244 = memref.load %arg2[%c3_57, %c1_58] : memref<4x4xf32, #tpu.memory_space<smem>>
    %c3_59 = arith.constant 3 : index
    %c2_60 = arith.constant 2 : index
    %245 = memref.load %arg2[%c3_59, %c2_60] : memref<4x4xf32, #tpu.memory_space<smem>>
    %c3_61 = arith.constant 3 : index
    %c3_62 = arith.constant 3 : index
    %246 = memref.load %arg2[%c3_61, %c3_62] : memref<4x4xf32, #tpu.memory_space<smem>>
    %247 = vector.broadcast %243 : f32 to vector<80x128xf32>
    %248 = arith.mulf %3, %247 : vector<80x128xf32>
    %249 = vector.broadcast %244 : f32 to vector<80x128xf32>
    %250 = arith.mulf %6, %249 : vector<80x128xf32>
    %251 = arith.addf %248, %250 : vector<80x128xf32>
    %252 = vector.broadcast %245 : f32 to vector<80x128xf32>
    %253 = arith.mulf %9, %252 : vector<80x128xf32>
    %254 = arith.addf %251, %253 : vector<80x128xf32>
    %255 = vector.broadcast %246 : f32 to vector<80x128xf32>
    %256 = arith.mulf %12, %255 : vector<80x128xf32>
    %257 = arith.addf %254, %256 : vector<80x128xf32>
    %258 = vector.broadcast %243 : f32 to vector<80x128xf32>
    %259 = arith.mulf %14, %258 : vector<80x128xf32>
    %260 = vector.broadcast %244 : f32 to vector<80x128xf32>
    %261 = arith.mulf %17, %260 : vector<80x128xf32>
    %262 = arith.addf %259, %261 : vector<80x128xf32>
    %263 = vector.broadcast %245 : f32 to vector<80x128xf32>
    %264 = arith.mulf %20, %263 : vector<80x128xf32>
    %265 = arith.addf %262, %264 : vector<80x128xf32>
    %266 = vector.broadcast %246 : f32 to vector<80x128xf32>
    %267 = arith.mulf %23, %266 : vector<80x128xf32>
    %268 = arith.addf %265, %267 : vector<80x128xf32>
    %269 = arith.maximumf %257, %268 : vector<80x128xf32>
    %270 = vector.broadcast %243 : f32 to vector<80x128xf32>
    %271 = arith.mulf %25, %270 : vector<80x128xf32>
    %272 = vector.broadcast %244 : f32 to vector<80x128xf32>
    %273 = arith.mulf %28, %272 : vector<80x128xf32>
    %274 = arith.addf %271, %273 : vector<80x128xf32>
    %275 = vector.broadcast %245 : f32 to vector<80x128xf32>
    %276 = arith.mulf %31, %275 : vector<80x128xf32>
    %277 = arith.addf %274, %276 : vector<80x128xf32>
    %278 = vector.broadcast %246 : f32 to vector<80x128xf32>
    %279 = arith.mulf %34, %278 : vector<80x128xf32>
    %280 = arith.addf %277, %279 : vector<80x128xf32>
    %281 = arith.maximumf %269, %280 : vector<80x128xf32>
    %282 = vector.broadcast %243 : f32 to vector<80x128xf32>
    %283 = arith.mulf %36, %282 : vector<80x128xf32>
    %284 = vector.broadcast %244 : f32 to vector<80x128xf32>
    %285 = arith.mulf %39, %284 : vector<80x128xf32>
    %286 = arith.addf %283, %285 : vector<80x128xf32>
    %287 = vector.broadcast %245 : f32 to vector<80x128xf32>
    %288 = arith.mulf %42, %287 : vector<80x128xf32>
    %289 = arith.addf %286, %288 : vector<80x128xf32>
    %290 = vector.broadcast %246 : f32 to vector<80x128xf32>
    %291 = arith.mulf %45, %290 : vector<80x128xf32>
    %292 = arith.addf %289, %291 : vector<80x128xf32>
    %293 = arith.maximumf %281, %292 : vector<80x128xf32>
    %c79_i32_63 = arith.constant 79 : i32
    %294 = tpu.dynamic_rotate %293 by %c79_i32_63 dim 0 : vector<80x128xf32>, i32 -> vector<80x128xf32>
    %295 = arith.maximumf %293, %294 : vector<80x128xf32>
    %c78_i32_64 = arith.constant 78 : i32
    %296 = tpu.dynamic_rotate %293 by %c78_i32_64 dim 0 : vector<80x128xf32>, i32 -> vector<80x128xf32>
    %297 = arith.maximumf %295, %296 : vector<80x128xf32>
    %c77_i32_65 = arith.constant 77 : i32
    %298 = tpu.dynamic_rotate %293 by %c77_i32_65 dim 0 : vector<80x128xf32>, i32 -> vector<80x128xf32>
    %299 = arith.maximumf %297, %298 : vector<80x128xf32>
    %c3_66 = arith.constant 3 : index
    %300 = memref.load %arg3[%c3_66] : memref<4xf32, #tpu.memory_space<smem>>
    %cst_67 = arith.constant 0.000000e+00 : f32
    %301 = arith.subf %cst_67, %300 : f32
    %302 = vector.broadcast %301 : f32 to vector<80x128xf32>
    %303 = arith.maximumf %299, %302 : vector<80x128xf32>
    %c3_68 = arith.constant 3 : index
    %c0_69 = arith.constant 0 : index
    %c0_70 = arith.constant 0 : index
    %304 = vector.load %arg5[%c3_68, %c0_69, %c0_70] : memref<4x80x1xf32, #tpu.memory_space<vmem>>, vector<1x80x1xf32>
    %305 = vector.shape_cast %304 : vector<1x80x1xf32> to vector<80x1xf32>
    %306 = vector.broadcast %305 : vector<80x1xf32> to vector<80x128xf32>
    %307 = arith.mulf %303, %306 : vector<80x128xf32>
    %308 = arith.addf %242, %307 : vector<80x128xf32>
    %cst_71 = arith.constant dense<0.000000e+00> : vector<128xf32>
    %309 = vector.multi_reduction <add>, %308, %cst_71 [0] : vector<80x128xf32> to vector<128xf32>
    %310 = vector.shape_cast %309 : vector<128xf32> to vector<1x128xf32>
    %c0_72 = arith.constant 0 : index
    %311 = memref.load %arg4[%c0_72] : memref<1xf32, #tpu.memory_space<smem>>
    %312 = vector.broadcast %311 : f32 to vector<1x128xf32>
    %313 = arith.addf %310, %312 : vector<1x128xf32>
    %314 = math.absf %313 : vector<1x128xf32>
    %cst_73 = arith.constant 0.000000e+00 : f32
    %315 = vector.broadcast %cst_73 : f32 to vector<1x128xf32>
    %316 = arith.subf %315, %314 : vector<1x128xf32>
    %317 = math.exp %316 : vector<1x128xf32>
    %cst_74 = arith.constant 0.000000e+00 : f32
    %318 = vector.broadcast %cst_74 : f32 to vector<1x128xf32>
    %319 = arith.cmpf oge, %313, %318 : vector<1x128xf32>
    %cst_75 = arith.constant 1.000000e+00 : f32
    %320 = vector.broadcast %cst_75 : f32 to vector<1x128xf32>
    %321 = arith.addf %320, %317 : vector<1x128xf32>
    %cst_76 = arith.constant 1.000000e+00 : f32
    %322 = vector.broadcast %cst_76 : f32 to vector<1x128xf32>
    %323 = arith.divf %322, %321 : vector<1x128xf32>
    %cst_77 = arith.constant 1.000000e+00 : f32
    %324 = vector.broadcast %cst_77 : f32 to vector<1x128xf32>
    %325 = arith.addf %324, %317 : vector<1x128xf32>
    %326 = arith.divf %317, %325 : vector<1x128xf32>
    %327 = arith.select %319, %323, %326 : vector<1x128xi1>, vector<1x128xf32>
    %c0_78 = arith.constant 0 : index
    %c0_79 = arith.constant 0 : index
    %c0_80 = arith.constant 0 : index
    %328 = vector.load %arg6[%c0_78, %c0_79, %c0_80] : memref<1x1x128xf32, #tpu.memory_space<vmem>>, vector<1x1x128xf32>
    %329 = vector.shape_cast %328 : vector<1x1x128xf32> to vector<1x128xf32>
    %330 = vector.shape_cast %327 : vector<1x128xf32> to vector<1x1x128xf32>
    tpu.vector_store %arg6[%c0_78, %c0_79, %c0_80], %330 {strides = array<i32>} : memref<1x1x128xf32, #tpu.memory_space<vmem>>, vector<1x1x128xf32>,
    return
  }
  func.func @transform_0(%arg0: i32) -> (i32, i32, i32) {
    %c0_i32 = arith.constant 0 : i32
    %c0_i32_0 = arith.constant 0 : i32
    %c0_i32_1 = arith.constant 0 : i32
    return %c0_i32, %c0_i32_0, %arg0 : i32, i32, i32
  }
  func.func @transform_1(%arg0: i32) -> (i32, i32) {
    %c0_i32 = arith.constant 0 : i32
    %c0_i32_0 = arith.constant 0 : i32
    %c0_i32_1 = arith.constant 0 : i32
    return %c0_i32, %c0_i32_0 : i32, i32
  }
  func.func @transform_2(%arg0: i32) -> i32 {
    %c0_i32 = arith.constant 0 : i32
    %c0_i32_0 = arith.constant 0 : i32
    return %c0_i32 : i32
  }
  func.func @transform_3(%arg0: i32) -> i32 {
    %c0_i32 = arith.constant 0 : i32
    %c0_i32_0 = arith.constant 0 : i32
    return %c0_i32 : i32
  }
  func.func @transform_4(%arg0: i32) -> (i32, i32, i32) {
    %c0_i32 = arith.constant 0 : i32
    %c0_i32_0 = arith.constant 0 : i32
    %c0_i32_1 = arith.constant 0 : i32
    %c0_i32_2 = arith.constant 0 : i32
    return %c0_i32, %c0_i32_0, %c0_i32_1 : i32, i32, i32
  }
  func.func @transform_5(%arg0: i32) -> (i32, i32, i32) {
    %c0_i32 = arith.constant 0 : i32
    %c0_i32_0 = arith.constant 0 : i32
    %c0_i32_1 = arith.constant 0 : i32
    return %arg0, %c0_i32, %c0_i32_0 : i32, i32, i32
  }
}

</mosaic_0001>

<llo_original>
// kernel: _homo_frac_pre_impl.1
$region0: #{_homo_frac_pre_impl.1}
  #allocation0 [shape = 'u32[]', space=smem, size = 0x4, offset = 0x4, fixed_abs, tag = 'smem constant byte address 0x4 - core index']
  #allocation1 [shape = 'u32[144,128]{1,0:T(1,128)}', space=vmem, size = 0x12000, scoped, tag = 'internal scratch']
  #allocation2 [shape = 'f32[1]{0:T(128)S(6)}', space=smem, size = 0x200, scoped, tag = 'scoped memory for _homo_frac_pre_impl.1']
  %s0 = inlined_call_operand.vmem [shape: bf16[4,80,128], index: 0, kind: input, shape index: {}]
  %s1 = inlined_call_operand.vmem [shape: f32[4,4], index: 1, kind: input, shape index: {}]
  %s2 = inlined_call_operand.vmem [shape: f32[4], index: 2, kind: input, shape index: {}]
  %s3 = inlined_call_operand.<no memory space> [shape: f32[1], index: 3, kind: input, shape index: {}]
  %s4 = inlined_call_operand.vmem [shape: f32[4,80,1], index: 4, kind: input, shape index: {}]
  %s5 = inlined_call_operand.vmem [shape: f32[1,1,128], index: 5, kind: output, shape index: {}]
  %s6 = sld [smem:[#allocation0]]
  $region38: #{_homo_frac_pre_impl.1} parent=0
    _
  %s8 = ssub.s32 1, %s6
  %s9 = scalar_select 0, %s8, %s6
  %10 = sst [smem:[#allocation2]] %s3
  $region1: #{_homo_frac_pre_impl.1} parent=0
    #allocation3 [shape = 'u8[2048]{0}', space=smem, size = 0x800, scoped, tag = 'input window, operand 1, single buffered']
    #allocation4 [shape = 's32[1]{0}', space=sflag, size = 0x4, scoped, tag = 'scoped memory for _homo_frac_pre_impl.1']
    #allocation5 [shape = 'u8[512]{0}', space=smem, size = 0x200, scoped, tag = 'input window, operand 2, single buffered']
    #allocation6 [shape = 's32[1]{0}', space=sflag, size = 0x4, scoped, tag = 'scoped memory for _homo_frac_pre_impl.1']
    %11 = vsyncpa [#allocation4], 0
    %12 = vsyncpa [#allocation6], 0
    // Predicated region
    $region2: #{_homo_frac_pre_impl.1} parent=1 // pred_check
      _
    $region3: #{_homo_frac_pre_impl.1} parent=1 // pred_check_branch
      %14 = sbr.rel (0) target = $region5
    $region4: #{_homo_frac_pre_impl.1} parent=1 // pred_region
      _
    $region5: #{_homo_frac_pre_impl.1} parent=1 // pred_fallthru
      _
    // Predicated region
    $region6: #{_homo_frac_pre_impl.1} parent=1 // pred_check
      _
    $region7: #{_homo_frac_pre_impl.1} parent=1 // pred_check_branch
      %16 = sbr.rel (0) target = $region9
    $region8: #{_homo_frac_pre_impl.1} parent=1 // pred_region
      %s18 = ssub.s32 64, 64
      %19 = vsyncadd [#allocation4], %s18
      %s21 = sshll.u32 %s1, 4
      %s22 = int_to_ptr.vmem [resolvable:$true] %s21
      %24 = dma.vmem_to_smem %s22, 64, [#allocation3], [#allocation4]
    $region9: #{_homo_frac_pre_impl.1} parent=1 // pred_fallthru
      _
    // Predicated region
    $region10: #{_homo_frac_pre_impl.1} parent=1 // pred_check
      _
    $region11: #{_homo_frac_pre_impl.1} parent=1 // pred_check_branch
      %26 = sbr.rel (0) target = $region13
    $region12: #{_homo_frac_pre_impl.1} parent=1 // pred_region
      %s28 = ssub.s32 16, 16
      %29 = vsyncadd [#allocation6], %s28
      %s31 = sshll.u32 %s2, 4
      %s32 = int_to_ptr.vmem [resolvable:$true] %s31
      %34 = dma.vmem_to_smem %s32, 16, [#allocation5], [#allocation6]
    $region13: #{_homo_frac_pre_impl.1} parent=1 // pred_fallthru
      _
    // Predicated region
    $region14: #{_homo_frac_pre_impl.1} parent=1 // pred_check
      _
    $region15: #{_homo_frac_pre_impl.1} parent=1 // pred_check_branch
      %36 = sbr.rel (0) target = $region17
    $region16: #{_homo_frac_pre_impl.1} parent=1 // pred_region
      _
    $region17: #{_homo_frac_pre_impl.1} parent=1 // pred_fallthru
      _
    // Predicated region
    $region18: #{_homo_frac_pre_impl.1} parent=1 // pred_check
      _
    $region19: #{_homo_frac_pre_impl.1} parent=1 // pred_check_branch
      %38 = sbr.rel (0) target = $region21
    $region20: #{_homo_frac_pre_impl.1} parent=1 // pred_region
      _
    $region21: #{_homo_frac_pre_impl.1} parent=1 // pred_fallthru
      _
    // Predicated region
    $region22: #{_homo_frac_pre_impl.1} parent=1 // pred_check
      _
    $region23: #{_homo_frac_pre_impl.1} parent=1 // pred_check_branch
      %40 = sbr.rel (0) target = $region25
    $region24: #{_homo_frac_pre_impl.1} parent=1 // pred_region
      %41 = dma.done [#allocation4], 64
    $region25: #{_homo_frac_pre_impl.1} parent=1 // pred_fallthru
      _
    // Predicated region
    $region26: #{_homo_frac_pre_impl.1} parent=1 // pred_check
      _
    $region27: #{_homo_frac_pre_impl.1} parent=1 // pred_check_branch
      %43 = sbr.rel (0) target = $region29
    $region28: #{_homo_frac_pre_impl.1} parent=1 // pred_region
      %44 = dma.done [#allocation6], 16
    $region29: #{_homo_frac_pre_impl.1} parent=1 // pred_fallthru
      _
    %45 = sfence
    %v46 = vld [vmem:[%s0] sm:$0xf]
    %v47 = vld [vmem:[%s0 + $0x4] sm:$0xf]
    %v48 = vld [vmem:[%s0 + $0x8] sm:$0xf]
    %v49 = vld [vmem:[%s0 + $0xc] sm:$0xf]
    %v50 = vld [vmem:[%s0 + $0x10] sm:$0xf]
    %v51 = vld [vmem:[%s0 + $0x14] sm:$0xf]
    %v52 = vld [vmem:[%s0 + $0x18] sm:$0xf]
    %v53 = vld [vmem:[%s0 + $0x1c] sm:$0xf]
    %v54 = vld [vmem:[%s0 + $0x20] sm:$0xf]
    %v55 = vld [vmem:[%s0 + $0x24] sm:$0xf]
    %v56 = vld [vmem:[%s0 + $0x28] sm:$0xf]
    %v57 = vld [vmem:[%s0 + $0x2c] sm:$0xf]
    %v58 = vld [vmem:[%s0 + $0x30] sm:$0xf]
    %v59 = vld [vmem:[%s0 + $0x34] sm:$0xf]
    %v60 = vld [vmem:[%s0 + $0x38] sm:$0xf]
    %v61 = vld [vmem:[%s0 + $0x3c] sm:$0xf]
    %v62 = vld [vmem:[%s0 + $0x40] sm:$0xf]
    %v63 = vld [vmem:[%s0 + $0x44] sm:$0xf]
    %v64 = vld [vmem:[%s0 + $0x48] sm:$0xf]
    %v65 = vld [vmem:[%s0 + $0x4c] sm:$0xf]
    %v66 = vld [vmem:[%s0 + $0x50] sm:$0xf]
    %v67 = vld [vmem:[%s0 + $0x54] sm:$0xf]
    %v68 = vld [vmem:[%s0 + $0x58] sm:$0xf]
    %v69 = vld [vmem:[%s0 + $0x5c] sm:$0xf]
    %v70 = vld [vmem:[%s0 + $0x60] sm:$0xf]
    %v71 = vld [vmem:[%s0 + $0x64] sm:$0xf]
    %v72 = vld [vmem:[%s0 + $0x68] sm:$0xf]
    %v73 = vld [vmem:[%s0 + $0x6c] sm:$0xf]
    %v74 = vld [vmem:[%s0 + $0x70] sm:$0xf]
    %v75 = vld [vmem:[%s0 + $0x74] sm:$0xf]
    %v76 = vld [vmem:[%s0 + $0x78] sm:$0xf]
    %v77 = vld [vmem:[%s0 + $0x7c] sm:$0xf]
    %v78 = vld [vmem:[%s0 + $0x80] sm:$0xf]
    %v79 = vld [vmem:[%s0 + $0x84] sm:$0xf]
    %v80 = vld [vmem:[%s0 + $0x88] sm:$0xf]
    %v81 = vld [vmem:[%s0 + $0x8c] sm:$0xf]
    %v82 = vld [vmem:[%s0 + $0x90] sm:$0xf]
    %v83 = vld [vmem:[%s0 + $0x94] sm:$0xf]
    %v84 = vld [vmem:[%s0 + $0x98] sm:$0xf]
    %v85 = vld [vmem:[%s0 + $0x9c] sm:$0xf]
    %v86 = vunpack.c.l.bf16 %v46
    %v87 = vunpack.c.l.bf16 %v47
    %v88 = vunpack.c.l.bf16 %v48
    %v89 = vunpack.c.l.bf16 %v49
    %v90 = vunpack.c.l.bf16 %v50
    %v91 = vunpack.c.l.bf16 %v51
    %v92 = vunpack.c.l.bf16 %v52
    %v93 = vunpack.c.l.bf16 %v53
    %v94 = vunpack.c.l.bf16 %v54
    %v95 = vunpack.c.l.bf16 %v55
    %v96 = vunpack.c.l.bf16 %v56
    %v97 = vunpack.c.l.bf16 %v57
    %v98 = vunpack.c.l.bf16 %v58
    %v99 = vunpack.c.l.bf16 %v59
    %v100 = vunpack.c.l.bf16 %v60
    %v101 = vunpack.c.l.bf16 %v61
    %v102 = vunpack.c.l.bf16 %v62
    %v103 = vunpack.c.l.bf16 %v63
    %v104 = vunpack.c.l.bf16 %v64
    %v105 = vunpack.c.l.bf16 %v65
    %v106 = vunpack.c.l.bf16 %v66
    %v107 = vunpack.c.l.bf16 %v67
    %v108 = vunpack.c.l.bf16 %v68
    %v109 = vunpack.c.l.bf16 %v69
    %v110 = vunpack.c.l.bf16 %v70
    %v111 = vunpack.c.l.bf16 %v71
    %v112 = vunpack.c.l.bf16 %v72
    %v113 = vunpack.c.l.bf16 %v73
    %v114 = vunpack.c.l.bf16 %v74
    %v115 = vunpack.c.l.bf16 %v75
    %v116 = vunpack.c.l.bf16 %v76
    %v117 = vunpack.c.l.bf16 %v77
    %v118 = vunpack.c.l.bf16 %v78
    %v119 = vunpack.c.l.bf16 %v79
    %v120 = vunpack.c.l.bf16 %v80
    %v121 = vunpack.c.l.bf16 %v81
    %v122 = vunpack.c.l.bf16 %v82
    %v123 = vunpack.c.l.bf16 %v83
    %v124 = vunpack.c.l.bf16 %v84
    %v125 = vunpack.c.l.bf16 %v85
    %v126 = vrot.slane %v86, 1
    %v127 = vrot.slane %v87, 1
    %v128 = vrot.slane %v88, 1
    %v129 = vrot.slane %v89, 1
    %v130 = vrot.slane %v90, 1
    %v131 = vrot.slane %v91, 1
    %v132 = vrot.slane %v92, 1
    %v133 = vrot.slane %v93, 1
    %v134 = vrot.slane %v94, 1
    %v135 = vrot.slane %v95, 1
    %v136 = vlaneseq
    %v137 = vshrl.u32 %v136, 7
    %vm138 = vcmp.lt.s32.totalorder %v137, 7
    %v139 = vsel %vm138, %v134, %v135
    %v140 = vsel %vm138, %v133, %v134
    %v141 = vsel %vm138, %v132, %v133
    %v142 = vsel %vm138, %v131, %v132
    %v143 = vsel %vm138, %v130, %v131
    %v144 = vsel %vm138, %v129, %v130
    %v145 = vsel %vm138, %v128, %v129
    %v146 = vsel %vm138, %v127, %v128
    %v147 = vsel %vm138, %v126, %v127
    %v148 = vsel %vm138, %v135, %v126
    %v149 = vrot.slane %v86, 2
    %v150 = vrot.slane %v87, 2
    %v151 = vrot.slane %v88, 2
    %v152 = vrot.slane %v89, 2
    %v153 = vrot.slane %v90, 2
    %v154 = vrot.slane %v91, 2
    %v155 = vrot.slane %v92, 2
    %v156 = vrot.slane %v93, 2
    %v157 = vrot.slane %v94, 2
    %v158 = vrot.slane %v95, 2
    %vm159 = vcmp.lt.s32.totalorder %v137, 6
    %v160 = vsel %vm159, %v157, %v158
    %v161 = vsel %vm159, %v156, %v157
    %v162 = vsel %vm159, %v155, %v156
    %v163 = vsel %vm159, %v154, %v155
    %v164 = vsel %vm159, %v153, %v154
    %v165 = vsel %vm159, %v152, %v153
    %v166 = vsel %vm159, %v151, %v152
    %v167 = vsel %vm159, %v150, %v151
    %v168 = vsel %vm159, %v149, %v150
    %v169 = vsel %vm159, %v158, %v149
    %v170 = vrot.slane %v86, 3
    %v171 = vrot.slane %v87, 3
    %v172 = vrot.slane %v88, 3
    %v173 = vrot.slane %v89, 3
    %v174 = vrot.slane %v90, 3
    %v175 = vrot.slane %v91, 3
    %v176 = vrot.slane %v92, 3
    %v177 = vrot.slane %v93, 3
    %v178 = vrot.slane %v94, 3
    %v179 = vrot.slane %v95, 3
    %vm180 = vcmp.lt.s32.totalorder %v137, 5
    %v181 = vsel %vm180, %v178, %v179
    %v182 = vsel %vm180, %v177, %v178
    %v183 = vsel %vm180, %v176, %v177
    %v184 = vsel %vm180, %v175, %v176
    %v185 = vsel %vm180, %v174, %v175
    %v186 = vsel %vm180, %v173, %v174
    %v187 = vsel %vm180, %v172, %v173
    %v188 = vsel %vm180, %v171, %v172
    %v189 = vsel %vm180, %v170, %v171
    %v190 = vsel %vm180, %v179, %v170
    %v191 = vrot.slane %v96, 1
    %v192 = vrot.slane %v97, 1
    %v193 = vrot.slane %v98, 1
    %v194 = vrot.slane %v99, 1
    %v195 = vrot.slane %v100, 1
    %v196 = vrot.slane %v101, 1
    %v197 = vrot.slane %v102, 1
    %v198 = vrot.slane %v103, 1
    %v199 = vrot.slane %v104, 1
    %v200 = vrot.slane %v105, 1
    %v201 = vsel %vm138, %v199, %v200
    %v202 = vsel %vm138, %v198, %v199
    %v203 = vsel %vm138, %v197, %v198
    %v204 = vsel %vm138, %v196, %v197
    %v205 = vsel %vm138, %v195, %v196
    %v206 = vsel %vm138, %v194, %v195
    %v207 = vsel %vm138, %v193, %v194
    %v208 = vsel %vm138, %v192, %v193
    %v209 = vsel %vm138, %v191, %v192
    %v210 = vsel %vm138, %v200, %v191
    %v211 = vrot.slane %v96, 2
    %v212 = vrot.slane %v97, 2
    %v213 = vrot.slane %v98, 2
    %v214 = vrot.slane %v99, 2
    %v215 = vrot.slane %v100, 2
    %v216 = vrot.slane %v101, 2
    %v217 = vrot.slane %v102, 2
    %v218 = vrot.slane %v103, 2
    %v219 = vrot.slane %v104, 2
    %v220 = vrot.slane %v105, 2
    %v221 = vsel %vm159, %v219, %v220
    %v222 = vsel %vm159, %v218, %v219
    %v223 = vsel %vm159, %v217, %v218
    %v224 = vsel %vm159, %v216, %v217
    %v225 = vsel %vm159, %v215, %v216
    %v226 = vsel %vm159, %v214, %v215
    %v227 = vsel %vm159, %v213, %v214
    %v228 = vsel %vm159, %v212, %v213
    %v229 = vsel %vm159, %v211, %v212
    %v230 = vsel %vm159, %v220, %v211
    %v231 = vrot.slane %v96, 3
    %v232 = vrot.slane %v97, 3
    %v233 = vrot.slane %v98, 3
    %v234 = vrot.slane %v99, 3
    %v235 = vrot.slane %v100, 3
    %v236 = vrot.slane %v101, 3
    %v237 = vrot.slane %v102, 3
    %v238 = vrot.slane %v103, 3
    %v239 = vrot.slane %v104, 3
    %v240 = vrot.slane %v105, 3
    %v241 = vsel %vm180, %v239, %v240
    %v242 = vsel %vm180, %v238, %v239
    %v243 = vsel %vm180, %v237, %v238
    %v244 = vsel %vm180, %v236, %v237
    %v245 = vsel %vm180, %v235, %v236
    %v246 = vsel %vm180, %v234, %v235
    %v247 = vsel %vm180, %v233, %v234
    %v248 = vsel %vm180, %v232, %v233
    %v249 = vsel %vm180, %v231, %v232
    %v250 = vsel %vm180, %v240, %v231
    %v251 = vrot.slane %v106, 1
    %v252 = vrot.slane %v107, 1
    %v253 = vrot.slane %v108, 1
    %v254 = vrot.slane %v109, 1
    %v255 = vrot.slane %v110, 1
    %v256 = vrot.slane %v111, 1
    %v257 = vrot.slane %v112, 1
    %v258 = vrot.slane %v113, 1
    %v259 = vrot.slane %v114, 1
    %v260 = vrot.slane %v115, 1
    %v261 = vsel %vm138, %v259, %v260
    %v262 = vsel %vm138, %v258, %v259
    %v263 = vsel %vm138, %v257, %v258
    %v264 = vsel %vm138, %v256, %v257
    %v265 = vsel %vm138, %v255, %v256
    %v266 = vsel %vm138, %v254, %v255
    %v267 = vsel %vm138, %v253, %v254
    %v268 = vsel %vm138, %v252, %v253
    %v269 = vsel %vm138, %v251, %v252
    %v270 = vsel %vm138, %v260, %v251
    %v271 = vrot.slane %v106, 2
    %v272 = vrot.slane %v107, 2
    %v273 = vrot.slane %v108, 2
    %v274 = vrot.slane %v109, 2
    %v275 = vrot.slane %v110, 2
    %v276 = vrot.slane %v111, 2
    %v277 = vrot.slane %v112, 2
    %v278 = vrot.slane %v113, 2
    %v279 = vrot.slane %v114, 2
    %v280 = vrot.slane %v115, 2
    %v281 = vsel %vm159, %v279, %v280
    %v282 = vsel %vm159, %v278, %v279
    %v283 = vsel %vm159, %v277, %v278
    %v284 = vsel %vm159, %v276, %v277
    %v285 = vsel %vm159, %v275, %v276
    %v286 = vsel %vm159, %v274, %v275
    %v287 = vsel %vm159, %v273, %v274
    %v288 = vsel %vm159, %v272, %v273
    %v289 = vsel %vm159, %v271, %v272
    %v290 = vsel %vm159, %v280, %v271
    %v291 = vrot.slane %v106, 3
    %v292 = vrot.slane %v107, 3
    %v293 = vrot.slane %v108, 3
    %v294 = vrot.slane %v109, 3
    %v295 = vrot.slane %v110, 3
    %v296 = vrot.slane %v111, 3
    %v297 = vrot.slane %v112, 3
    %v298 = vrot.slane %v113, 3
    %v299 = vrot.slane %v114, 3
    %v300 = vrot.slane %v115, 3
    %v301 = vsel %vm180, %v299, %v300
    %v302 = vsel %vm180, %v298, %v299
    %v303 = vsel %vm180, %v297, %v298
    %v304 = vsel %vm180, %v296, %v297
    %v305 = vsel %vm180, %v295, %v296
    %v306 = vsel %vm180, %v294, %v295
    %v307 = vsel %vm180, %v293, %v294
    %v308 = vsel %vm180, %v292, %v293
    %v309 = vsel %vm180, %v291, %v292
    %v310 = vsel %vm180, %v300, %v291
    %v311 = vrot.slane %v116, 1
    %v312 = vrot.slane %v117, 1
    %v313 = vrot.slane %v118, 1
    %v314 = vrot.slane %v119, 1
    %v315 = vrot.slane %v120, 1
    %v316 = vrot.slane %v121, 1
    %v317 = vrot.slane %v122, 1
    %v318 = vrot.slane %v123, 1
    %v319 = vrot.slane %v124, 1
    %v320 = vrot.slane %v125, 1
    %v321 = vsel %vm138, %v319, %v320
    %v322 = vsel %vm138, %v318, %v319
    %v323 = vsel %vm138, %v317, %v318
    %v324 = vsel %vm138, %v316, %v317
    %v325 = vsel %vm138, %v315, %v316
    %v326 = vsel %vm138, %v314, %v315
    %v327 = vsel %vm138, %v313, %v314
    %v328 = vsel %vm138, %v312, %v313
    %v329 = vsel %vm138, %v311, %v312
    %v330 = vsel %vm138, %v320, %v311
    %v331 = vrot.slane %v116, 2
    %v332 = vrot.slane %v117, 2
    %v333 = vrot.slane %v118, 2
    %v334 = vrot.slane %v119, 2
    %v335 = vrot.slane %v120, 2
    %v336 = vrot.slane %v121, 2
    %v337 = vrot.slane %v122, 2
    %v338 = vrot.slane %v123, 2
    %v339 = vrot.slane %v124, 2
    %v340 = vrot.slane %v125, 2
    %v341 = vsel %vm159, %v339, %v340
    %v342 = vsel %vm159, %v338, %v339
    %v343 = vsel %vm159, %v337, %v338
    %v344 = vsel %vm159, %v336, %v337
    %v345 = vsel %vm159, %v335, %v336
    %v346 = vsel %vm159, %v334, %v335
    %v347 = vsel %vm159, %v333, %v334
    %v348 = vsel %vm159, %v332, %v333
    %v349 = vsel %vm159, %v331, %v332
    %v350 = vsel %vm159, %v340, %v331
    %v351 = vrot.slane %v116, 3
    %v352 = vrot.slane %v117, 3
    %v353 = vrot.slane %v118, 3
    %v354 = vrot.slane %v119, 3
    %v355 = vrot.slane %v120, 3
    %v356 = vrot.slane %v121, 3
    %v357 = vrot.slane %v122, 3
    %v358 = vrot.slane %v123, 3
    %v359 = vrot.slane %v124, 3
    %v360 = vrot.slane %v125, 3
    %v361 = vsel %vm180, %v359, %v360
    %v362 = vsel %vm180, %v358, %v359
    %v363 = vsel %vm180, %v357, %v358
    %v364 = vsel %vm180, %v356, %v357
    %v365 = vsel %vm180, %v355, %v356
    %v366 = vsel %vm180, %v354, %v355
    %v367 = vsel %vm180, %v353, %v354
    %v368 = vsel %vm180, %v352, %v353
    %v369 = vsel %vm180, %v351, %v352
    %v370 = vsel %vm180, %v360, %v351
    %s371 = sld [smem:[#allocation3]]
    %s372 = sld [smem:[#allocation3 + $0x1]]
    %s373 = sld [smem:[#allocation3 + $0x2]]
    %s374 = sld [smem:[#allocation3 + $0x3]]
    %v375 = vstv %s371
    %v376 = vmul.f32 %v86, %v375
    %v377 = vmul.f32 %v87, %v375
    %v378 = vmul.f32 %v88, %v375
    %v379 = vmul.f32 %v89, %v375
    %v380 = vmul.f32 %v90, %v375
    %v381 = vmul.f32 %v91, %v375
    %v382 = vmul.f32 %v92, %v375
    %v383 = vmul.f32 %v93, %v375
    %v384 = vmul.f32 %v94, %v375
    %v385 = vmul.f32 %v95, %v375
    %v386 = vstv %s372
    %v387 = vmul.f32 %v147, %v386
    %v388 = vmul.f32 %v146, %v386
    %v389 = vmul.f32 %v145, %v386
    %v390 = vmul.f32 %v144, %v386
    %v391 = vmul.f32 %v143, %v386
    %v392 = vmul.f32 %v142, %v386
    %v393 = vmul.f32 %v141, %v386
    %v394 = vmul.f32 %v140, %v386
    %v395 = vmul.f32 %v139, %v386
    %v396 = vmul.f32 %v148, %v386
    %v397 = vadd.f32 %v376, %v387
    %v398 = vadd.f32 %v377, %v388
    %v399 = vadd.f32 %v378, %v389
    %v400 = vadd.f32 %v379, %v390
    %v401 = vadd.f32 %v380, %v391
    %v402 = vadd.f32 %v381, %v392
    %v403 = vadd.f32 %v382, %v393
    %v404 = vadd.f32 %v383, %v394
    %v405 = vadd.f32 %v384, %v395
    %v406 = vadd.f32 %v385, %v396
    %v407 = vstv %s373
    %v408 = vmul.f32 %v168, %v407
    %v409 = vmul.f32 %v167, %v407
    %v410 = vmul.f32 %v166, %v407
    %v411 = vmul.f32 %v165, %v407
    %v412 = vmul.f32 %v164, %v407
    %v413 = vmul.f32 %v163, %v407
    %v414 = vmul.f32 %v162, %v407
    %v415 = vmul.f32 %v161, %v407
    %v416 = vmul.f32 %v160, %v407
    %v417 = vmul.f32 %v169, %v407
    %v418 = vadd.f32 %v397, %v408
    %v419 = vadd.f32 %v398, %v409
    %v420 = vadd.f32 %v399, %v410
    %v421 = vadd.f32 %v400, %v411
    %v422 = vadd.f32 %v401, %v412
    %v423 = vadd.f32 %v402, %v413
    %v424 = vadd.f32 %v403, %v414
    %v425 = vadd.f32 %v404, %v415
    %v426 = vadd.f32 %v405, %v416
    %v427 = vadd.f32 %v406, %v417
    %v428 = vstv %s374
    %v429 = vmul.f32 %v189, %v428
    %v430 = vmul.f32 %v188, %v428
    %v431 = vmul.f32 %v187, %v428
    %v432 = vmul.f32 %v186, %v428
    %v433 = vmul.f32 %v185, %v428
    %v434 = vmul.f32 %v184, %v428
    %v435 = vmul.f32 %v183, %v428
    %v436 = vmul.f32 %v182, %v428
    %v437 = vmul.f32 %v181, %v428
    %v438 = vmul.f32 %v190, %v428
    %v439 = vadd.f32 %v418, %v429
    %v440 = vadd.f32 %v419, %v430
    %v441 = vadd.f32 %v420, %v431
    %v442 = vadd.f32 %v421, %v432
    %v443 = vadd.f32 %v422, %v433
    %v444 = vadd.f32 %v423, %v434
    %v445 = vadd.f32 %v424, %v435
    %v446 = vadd.f32 %v425, %v436
    %v447 = vadd.f32 %v426, %v437
    %v448 = vadd.f32 %v427, %v438
    %v449 = vmul.f32 %v96, %v375
    %v450 = vmul.f32 %v97, %v375
    %v451 = vmul.f32 %v98, %v375
    %v452 = vmul.f32 %v99, %v375
    %v453 = vmul.f32 %v100, %v375
    %v454 = vmul.f32 %v101, %v375
    %v455 = vmul.f32 %v102, %v375
    %v456 = vmul.f32 %v103, %v375
    %v457 = vmul.f32 %v104, %v375
    %v458 = vmul.f32 %v105, %v375
    %v459 = vmul.f32 %v209, %v386
    %v460 = vmul.f32 %v208, %v386
    %v461 = vmul.f32 %v207, %v386
    %v462 = vmul.f32 %v206, %v386
    %v463 = vmul.f32 %v205, %v386
    %v464 = vmul.f32 %v204, %v386
    %v465 = vmul.f32 %v203, %v386
    %v466 = vmul.f32 %v202, %v386
    %v467 = vmul.f32 %v201, %v386
    %v468 = vmul.f32 %v210, %v386
    %v469 = vadd.f32 %v449, %v459
    %v470 = vadd.f32 %v450, %v460
    %v471 = vadd.f32 %v451, %v461
    %v472 = vadd.f32 %v452, %v462
    %v473 = vadd.f32 %v453, %v463
    %v474 = vadd.f32 %v454, %v464
    %v475 = vadd.f32 %v455, %v465
    %v476 = vadd.f32 %v456, %v466
    %v477 = vadd.f32 %v457, %v467
    %v478 = vadd.f32 %v458, %v468
    %v479 = vmul.f32 %v229, %v407
    %v480 = vmul.f32 %v228, %v407
    %v481 = vmul.f32 %v227, %v407
    %v482 = vmul.f32 %v226, %v407
    %v483 = vmul.f32 %v225, %v407
    %v484 = vmul.f32 %v224, %v407
    %v485 = vmul.f32 %v223, %v407
    %v486 = vmul.f32 %v222, %v407
    %v487 = vmul.f32 %v221, %v407
    %v488 = vmul.f32 %v230, %v407
    %v489 = vadd.f32 %v469, %v479
    %v490 = vadd.f32 %v470, %v480
    %v491 = vadd.f32 %v471, %v481
    %v492 = vadd.f32 %v472, %v482
    %v493 = vadd.f32 %v473, %v483
    %v494 = vadd.f32 %v474, %v484
    %v495 = vadd.f32 %v475, %v485
    %v496 = vadd.f32 %v476, %v486
    %v497 = vadd.f32 %v477, %v487
    %v498 = vadd.f32 %v478, %v488
    %v499 = vmul.f32 %v249, %v428
    %v500 = vmul.f32 %v248, %v428
    %v501 = vmul.f32 %v247, %v428
    %v502 = vmul.f32 %v246, %v428
    %v503 = vmul.f32 %v245, %v428
    %v504 = vmul.f32 %v244, %v428
    %v505 = vmul.f32 %v243, %v428
    %v506 = vmul.f32 %v242, %v428
    %v507 = vmul.f32 %v241, %v428
    %v508 = vmul.f32 %v250, %v428
    %v509 = vadd.f32 %v489, %v499
    %v510 = vadd.f32 %v490, %v500
    %v511 = vadd.f32 %v491, %v501
    %v512 = vadd.f32 %v492, %v502
    %v513 = vadd.f32 %v493, %v503
    %v514 = vadd.f32 %v494, %v504
    %v515 = vadd.f32 %v495, %v505
    %v516 = vadd.f32 %v496, %v506
    %v517 = vadd.f32 %v497, %v507
    %v518 = vadd.f32 %v498, %v508
    %v519 = vmax.f32 %v439, %v509
    %v520 = vmax.f32 %v440, %v510
    %v521 = vmax.f32 %v441, %v511
    %v522 = vmax.f32 %v442, %v512
    %v523 = vmax.f32 %v443, %v513
    %v524 = vmax.f32 %v444, %v514
    %v525 = vmax.f32 %v445, %v515
    %v526 = vmax.f32 %v446, %v516
    %v527 = vmax.f32 %v447, %v517
    %v528 = vmax.f32 %v448, %v518
    %v529 = vmul.f32 %v106, %v375
    %v530 = vmul.f32 %v107, %v375
    %v531 = vmul.f32 %v108, %v375
    %v532 = vmul.f32 %v109, %v375
    %v533 = vmul.f32 %v110, %v375
    %v534 = vmul.f32 %v111, %v375
    %v535 = vmul.f32 %v112, %v375
    %v536 = vmul.f32 %v113, %v375
    %v537 = vmul.f32 %v114, %v375
    %v538 = vmul.f32 %v115, %v375
    %v539 = vmul.f32 %v269, %v386
    %v540 = vmul.f32 %v268, %v386
    %v541 = vmul.f32 %v267, %v386
    %v542 = vmul.f32 %v266, %v386
    %v543 = vmul.f32 %v265, %v386
    %v544 = vmul.f32 %v264, %v386
    %v545 = vmul.f32 %v263, %v386
    %v546 = vmul.f32 %v262, %v386
    %v547 = vmul.f32 %v261, %v386
    %v548 = vmul.f32 %v270, %v386
    %v549 = vadd.f32 %v529, %v539
    %v550 = vadd.f32 %v530, %v540
    %v551 = vadd.f32 %v531, %v541
    %v552 = vadd.f32 %v532, %v542
    %v553 = vadd.f32 %v533, %v543
    %v554 = vadd.f32 %v534, %v544
    %v555 = vadd.f32 %v535, %v545
    %v556 = vadd.f32 %v536, %v546
    %v557 = vadd.f32 %v537, %v547
    %v558 = vadd.f32 %v538, %v548
    %v559 = vmul.f32 %v289, %v407
    %v560 = vmul.f32 %v288, %v407
    %v561 = vmul.f32 %v287, %v407
    %v562 = vmul.f32 %v286, %v407
    %v563 = vmul.f32 %v285, %v407
    %v564 = vmul.f32 %v284, %v407
    %v565 = vmul.f32 %v283, %v407
    %v566 = vmul.f32 %v282, %v407
    %v567 = vmul.f32 %v281, %v407
    %v568 = vmul.f32 %v290, %v407
    %v569 = vadd.f32 %v549, %v559
    %v570 = vadd.f32 %v550, %v560
    %v571 = vadd.f32 %v551, %v561
    %v572 = vadd.f32 %v552, %v562
    %v573 = vadd.f32 %v553, %v563
    %v574 = vadd.f32 %v554, %v564
    %v575 = vadd.f32 %v555, %v565
    %v576 = vadd.f32 %v556, %v566
    %v577 = vadd.f32 %v557, %v567
    %v578 = vadd.f32 %v558, %v568
    %v579 = vmul.f32 %v309, %v428
    %v580 = vmul.f32 %v308, %v428
    %v581 = vmul.f32 %v307, %v428
    %v582 = vmul.f32 %v306, %v428
    %v583 = vmul.f32 %v305, %v428
    %v584 = vmul.f32 %v304, %v428
    %v585 = vmul.f32 %v303, %v428
    %v586 = vmul.f32 %v302, %v428
    %v587 = vmul.f32 %v301, %v428
    %v588 = vmul.f32 %v310, %v428
    %v589 = vadd.f32 %v569, %v579
    %v590 = vadd.f32 %v570, %v580
    %v591 = vadd.f32 %v571, %v581
    %v592 = vadd.f32 %v572, %v582
    %v593 = vadd.f32 %v573, %v583
    %v594 = vadd.f32 %v574, %v584
    %v595 = vadd.f32 %v575, %v585
    %v596 = vadd.f32 %v576, %v586
    %v597 = vadd.f32 %v577, %v587
    %v598 = vadd.f32 %v578, %v588
    %v599 = vmax.f32 %v519, %v589
    %v600 = vmax.f32 %v520, %v590
    %v601 = vmax.f32 %v521, %v591
    %v602 = vmax.f32 %v522, %v592
    %v603 = vmax.f32 %v523, %v593
    %v604 = vmax.f32 %v524, %v594
    %v605 = vmax.f32 %v525, %v595
    %v606 = vmax.f32 %v526, %v596
    %v607 = vmax.f32 %v527, %v597
    %v608 = vmax.f32 %v528, %v598
    %v609 = vmul.f32 %v116, %v375
    %v610 = vmul.f32 %v117, %v375
    %v611 = vmul.f32 %v118, %v375
    %v612 = vmul.f32 %v119, %v375
    %v613 = vmul.f32 %v120, %v375
    %v614 = vmul.f32 %v121, %v375
    %v615 = vmul.f32 %v122, %v375
    %v616 = vmul.f32 %v123, %v375
    %v617 = vmul.f32 %v124, %v375
    %v618 = vmul.f32 %v125, %v375
    %v619 = vmul.f32 %v329, %v386
    %v620 = vmul.f32 %v328, %v386
    %v621 = vmul.f32 %v327, %v386
    %v622 = vmul.f32 %v326, %v386
    %v623 = vmul.f32 %v325, %v386
    %v624 = vmul.f32 %v324, %v386
    %v625 = vmul.f32 %v323, %v386
    %v626 = vmul.f32 %v322, %v386
    %v627 = vmul.f32 %v321, %v386
    %v628 = vmul.f32 %v330, %v386
    %v629 = vadd.f32 %v609, %v619
    %v630 = vadd.f32 %v610, %v620
    %v631 = vadd.f32 %v611, %v621
    %v632 = vadd.f32 %v612, %v622
    %v633 = vadd.f32 %v613, %v623
    %v634 = vadd.f32 %v614, %v624
    %v635 = vadd.f32 %v615, %v625
    %v636 = vadd.f32 %v616, %v626
    %v637 = vadd.f32 %v617, %v627
    %v638 = vadd.f32 %v618, %v628
    %v639 = vmul.f32 %v349, %v407
    %v640 = vmul.f32 %v348, %v407
    %v641 = vmul.f32 %v347, %v407
    %v642 = vmul.f32 %v346, %v407
    %v643 = vmul.f32 %v345, %v407
    %v644 = vmul.f32 %v344, %v407
    %v645 = vmul.f32 %v343, %v407
    %v646 = vmul.f32 %v342, %v407
    %v647 = vmul.f32 %v341, %v407
    %v648 = vmul.f32 %v350, %v407
    %v649 = vadd.f32 %v629, %v639
    %v650 = vadd.f32 %v630, %v640
    %v651 = vadd.f32 %v631, %v641
    %v652 = vadd.f32 %v632, %v642
    %v653 = vadd.f32 %v633, %v643
    %v654 = vadd.f32 %v634, %v644
    %v655 = vadd.f32 %v635, %v645
    %v656 = vadd.f32 %v636, %v646
    %v657 = vadd.f32 %v637, %v647
    %v658 = vadd.f32 %v638, %v648
    %v659 = vmul.f32 %v369, %v428
    %v660 = vmul.f32 %v368, %v428
    %v661 = vmul.f32 %v367, %v428
    %v662 = vmul.f32 %v366, %v428
    %v663 = vmul.f32 %v365, %v428
    %v664 = vmul.f32 %v364, %v428
    %v665 = vmul.f32 %v363, %v428
    %v666 = vmul.f32 %v362, %v428
    %v667 = vmul.f32 %v361, %v428
    %v668 = vmul.f32 %v370, %v428
    %v669 = vadd.f32 %v649, %v659
    %v670 = vadd.f32 %v650, %v660
    %v671 = vadd.f32 %v651, %v661
    %v672 = vadd.f32 %v652, %v662
    %v673 = vadd.f32 %v653, %v663
    %v674 = vadd.f32 %v654, %v664
    %v675 = vadd.f32 %v655, %v665
    %v676 = vadd.f32 %v656, %v666
    %v677 = vadd.f32 %v657, %v667
    %v678 = vadd.f32 %v658, %v668
    %v679 = vmax.f32 %v599, %v669
    %v680 = vmax.f32 %v600, %v670
    %v681 = vmax.f32 %v601, %v671
    %v682 = vmax.f32 %v602, %v672
    %v683 = vmax.f32 %v603, %v673
    %v684 = vmax.f32 %v604, %v674
    %v685 = vmax.f32 %v605, %v675
    %v686 = vmax.f32 %v606, %v676
    %v687 = vmax.f32 %v607, %v677
    %v688 = vmax.f32 %v608, %v678
    %v689 = vrot.slane %v679, 1
    %v690 = vrot.slane %v680, 1
    %v691 = vrot.slane %v681, 1
    %v692 = vrot.slane %v682, 1
    %v693 = vrot.slane %v683, 1
    %v694 = vrot.slane %v684, 1
    %v695 = vrot.slane %v685, 1
    %v696 = vrot.slane %v686, 1
    %v697 = vrot.slane %v687, 1
    %v698 = vrot.slane %v688, 1
    %v699 = vsel %vm138, %v697, %v698
    %v700 = vsel %vm138, %v696, %v697
    %v701 = vsel %vm138, %v695, %v696
    %v702 = vsel %vm138, %v694, %v695
    %v703 = vsel %vm138, %v693, %v694
    %v704 = vsel %vm138, %v692, %v693
    %v705 = vsel %vm138, %v691, %v692
    %v706 = vsel %vm138, %v690, %v691
    %v707 = vsel %vm138, %v689, %v690
    %v708 = vsel %vm138, %v698, %v689
    %v709 = vmax.f32 %v679, %v707
    %v710 = vmax.f32 %v680, %v706
    %v711 = vmax.f32 %v681, %v705
    %v712 = vmax.f32 %v682, %v704
    %v713 = vmax.f32 %v683, %v703
    %v714 = vmax.f32 %v684, %v702
    %v715 = vmax.f32 %v685, %v701
    %v716 = vmax.f32 %v686, %v700
    %v717 = vmax.f32 %v687, %v699
    %v718 = vmax.f32 %v688, %v708
    %v719 = vrot.slane %v679, 2
    %v720 = vrot.slane %v680, 2
    %v721 = vrot.slane %v681, 2
    %v722 = vrot.slane %v682, 2
    %v723 = vrot.slane %v683, 2
    %v724 = vrot.slane %v684, 2
    %v725 = vrot.slane %v685, 2
    %v726 = vrot.slane %v686, 2
    %v727 = vrot.slane %v687, 2
    %v728 = vrot.slane %v688, 2
    %v729 = vsel %vm159, %v727, %v728
    %v730 = vsel %vm159, %v726, %v727
    %v731 = vsel %vm159, %v725, %v726
    %v732 = vsel %vm159, %v724, %v725
    %v733 = vsel %vm159, %v723, %v724
    %v734 = vsel %vm159, %v722, %v723
    %v735 = vsel %vm159, %v721, %v722
    %v736 = vsel %vm159, %v720, %v721
    %v737 = vsel %vm159, %v719, %v720
    %v738 = vsel %vm159, %v728, %v719
    %v739 = vmax.f32 %v709, %v737
    %v740 = vmax.f32 %v710, %v736
    %v741 = vmax.f32 %v711, %v735
    %v742 = vmax.f32 %v712, %v734
    %v743 = vmax.f32 %v713, %v733
    %v744 = vmax.f32 %v714, %v732
    %v745 = vmax.f32 %v715, %v731
    %v746 = vmax.f32 %v716, %v730
    %v747 = vmax.f32 %v717, %v729
    %v748 = vmax.f32 %v718, %v738
    %v749 = vrot.slane %v679, 3
    %v750 = vrot.slane %v680, 3
    %v751 = vrot.slane %v681, 3
    %v752 = vrot.slane %v682, 3
    %v753 = vrot.slane %v683, 3
    %v754 = vrot.slane %v684, 3
    %v755 = vrot.slane %v685, 3
    %v756 = vrot.slane %v686, 3
    %v757 = vrot.slane %v687, 3
    %v758 = vrot.slane %v688, 3
    %v759 = vsel %vm180, %v757, %v758
    %v760 = vsel %vm180, %v756, %v757
    %v761 = vsel %vm180, %v755, %v756
    %v762 = vsel %vm180, %v754, %v755
    %v763 = vsel %vm180, %v753, %v754
    %v764 = vsel %vm180, %v752, %v753
    %v765 = vsel %vm180, %v751, %v752
    %v766 = vsel %vm180, %v750, %v751
    %v767 = vsel %vm180, %v749, %v750
    %v768 = vsel %vm180, %v758, %v749
    %v769 = vmax.f32 %v739, %v767
    %v770 = vmax.f32 %v740, %v766
    %v771 = vmax.f32 %v741, %v765
    %v772 = vmax.f32 %v742, %v764
    %v773 = vmax.f32 %v743, %v763
    %v774 = vmax.f32 %v744, %v762
    %v775 = vmax.f32 %v745, %v761
    %v776 = vmax.f32 %v746, %v760
    %v777 = vmax.f32 %v747, %v759
    %v778 = vmax.f32 %v748, %v768
    %s779 = sld [smem:[#allocation5]]
    %s780 = ssub.f32 0.0, %s779
    %v781 = vstv %s780
    %v782 = vmax.f32 %v769, %v781
    %v783 = vmax.f32 %v770, %v781
    %v784 = vmax.f32 %v771, %v781
    %v785 = vmax.f32 %v772, %v781
    %v786 = vmax.f32 %v773, %v781
    %v787 = vmax.f32 %v774, %v781
    %v788 = vmax.f32 %v775, %v781
    %v789 = vmax.f32 %v776, %v781
    %v790 = vmax.f32 %v777, %v781
    %v791 = vmax.f32 %v778, %v781
    %v792 = vld [vmem:[%s4] sm:$0xff]
    %v793 = vld [vmem:[%s4 + $0x8] sm:$0xff]
    %v794 = vld [vmem:[%s4 + $0x10] sm:$0xff]
    %v795 = vld [vmem:[%s4 + $0x18] sm:$0xff]
    %v796 = vld [vmem:[%s4 + $0x20] sm:$0xff]
    %v797 = vld [vmem:[%s4 + $0x28] sm:$0xff]
    %v798 = vld [vmem:[%s4 + $0x30] sm:$0xff]
    %v799 = vld [vmem:[%s4 + $0x38] sm:$0xff]
    %v800 = vld [vmem:[%s4 + $0x40] sm:$0xff]
    %v801 = vld [vmem:[%s4 + $0x48] sm:$0xff]
    %803 = vset.pattern.permute.xlu0 0
    %804 = vperm.xlu0 %803, %v792
    %v805 = vpop.permute.xlu0 %804
    %808 = vset.pattern.permute.xlu0 0
    %809 = vperm.xlu0 %808, %v793
    %v810 = vpop.permute.xlu0 %809
    %813 = vset.pattern.permute.xlu0 0
    %814 = vperm.xlu0 %813, %v794
    %v815 = vpop.permute.xlu0 %814
    %818 = vset.pattern.permute.xlu0 0
    %819 = vperm.xlu0 %818, %v795
    %v820 = vpop.permute.xlu0 %819
    %823 = vset.pattern.permute.xlu0 0
    %824 = vperm.xlu0 %823, %v796
    %v825 = vpop.permute.xlu0 %824
    %828 = vset.pattern.permute.xlu0 0
    %829 = vperm.xlu0 %828, %v797
    %v830 = vpop.permute.xlu0 %829
    %833 = vset.pattern.permute.xlu0 0
    %834 = vperm.xlu0 %833, %v798
    %v835 = vpop.permute.xlu0 %834
    %838 = vset.pattern.permute.xlu0 0
    %839 = vperm.xlu0 %838, %v799
    %v840 = vpop.permute.xlu0 %839
    %843 = vset.pattern.permute.xlu0 0
    %844 = vperm.xlu0 %843, %v800
    %v845 = vpop.permute.xlu0 %844
    %848 = vset.pattern.permute.xlu0 0
    %849 = vperm.xlu0 %848, %v801
    %v850 = vpop.permute.xlu0 %849
    %v852 = vmul.f32 %v782, %v805
    %v853 = vmul.f32 %v783, %v810
    %v854 = vmul.f32 %v784, %v815
    %v855 = vmul.f32 %v785, %v820
    %v856 = vmul.f32 %v786, %v825
    %v857 = vmul.f32 %v787, %v830
    %v858 = vmul.f32 %v788, %v835
    %v859 = vmul.f32 %v789, %v840
    %v860 = vmul.f32 %v790, %v845
    %v861 = vmul.f32 %v791, %v850
    %s862 = sld [smem:[#allocation3 + $0x80]]
    %s863 = sld [smem:[#allocation3 + $0x81]]
    %s864 = sld [smem:[#allocation3 + $0x82]]
    %s865 = sld [smem:[#allocation3 + $0x83]]
    %v866 = vstv %s862
    %v867 = vmul.f32 %v86, %v866
    %v868 = vmul.f32 %v87, %v866
    %v869 = vmul.f32 %v88, %v866
    %v870 = vmul.f32 %v89, %v866
    %v871 = vmul.f32 %v90, %v866
    %v872 = vmul.f32 %v91, %v866
    %v873 = vmul.f32 %v92, %v866
    %v874 = vmul.f32 %v93, %v866
    %v875 = vmul.f32 %v94, %v866
    %v876 = vmul.f32 %v95, %v866
    %v877 = vstv %s863
    %v878 = vmul.f32 %v147, %v877
    %v879 = vmul.f32 %v146, %v877
    %v880 = vmul.f32 %v145, %v877
    %v881 = vmul.f32 %v144, %v877
    %v882 = vmul.f32 %v143, %v877
    %v883 = vmul.f32 %v142, %v877
    %v884 = vmul.f32 %v141, %v877
    %v885 = vmul.f32 %v140, %v877
    %v886 = vmul.f32 %v139, %v877
    %v887 = vmul.f32 %v148, %v877
    %v888 = vadd.f32 %v867, %v878
    %v889 = vadd.f32 %v868, %v879
    %v890 = vadd.f32 %v869, %v880
    %v891 = vadd.f32 %v870, %v881
    %v892 = vadd.f32 %v871, %v882
    %v893 = vadd.f32 %v872, %v883
    %v894 = vadd.f32 %v873, %v884
    %v895 = vadd.f32 %v874, %v885
    %v896 = vadd.f32 %v875, %v886
    %v897 = vadd.f32 %v876, %v887
    %v898 = vstv %s864
    %v899 = vmul.f32 %v168, %v898
    %v900 = vmul.f32 %v167, %v898
    %v901 = vmul.f32 %v166, %v898
    %v902 = vmul.f32 %v165, %v898
    %v903 = vmul.f32 %v164, %v898
    %v904 = vmul.f32 %v163, %v898
    %v905 = vmul.f32 %v162, %v898
    %v906 = vmul.f32 %v161, %v898
    %v907 = vmul.f32 %v160, %v898
    %v908 = vmul.f32 %v169, %v898
    %v909 = vadd.f32 %v888, %v899
    %v910 = vadd.f32 %v889, %v900
    %v911 = vadd.f32 %v890, %v901
    %v912 = vadd.f32 %v891, %v902
    %v913 = vadd.f32 %v892, %v903
    %v914 = vadd.f32 %v893, %v904
    %v915 = vadd.f32 %v894, %v905
    %v916 = vadd.f32 %v895, %v906
    %v917 = vadd.f32 %v896, %v907
    %v918 = vadd.f32 %v897, %v908
    %v919 = vstv %s865
    %v920 = vmul.f32 %v189, %v919
    %v921 = vmul.f32 %v188, %v919
    %v922 = vmul.f32 %v187, %v919
    %v923 = vmul.f32 %v186, %v919
    %v924 = vmul.f32 %v185, %v919
    %v925 = vmul.f32 %v184, %v919
    %v926 = vmul.f32 %v183, %v919
    %v927 = vmul.f32 %v182, %v919
    %v928 = vmul.f32 %v181, %v919
    %v929 = vmul.f32 %v190, %v919
    %v930 = vadd.f32 %v909, %v920
    %v931 = vadd.f32 %v910, %v921
    %v932 = vadd.f32 %v911, %v922
    %v933 = vadd.f32 %v912, %v923
    %v934 = vadd.f32 %v913, %v924
    %v935 = vadd.f32 %v914, %v925
    %v936 = vadd.f32 %v915, %v926
    %v937 = vadd.f32 %v916, %v927
    %v938 = vadd.f32 %v917, %v928
    %v939 = vadd.f32 %v918, %v929
    %v940 = vmul.f32 %v96, %v866
    %v941 = vmul.f32 %v97, %v866
    %v942 = vmul.f32 %v98, %v866
    %v943 = vmul.f32 %v99, %v866
    %v944 = vmul.f32 %v100, %v866
    %v945 = vmul.f32 %v101, %v866
    %v946 = vmul.f32 %v102, %v866
    %v947 = vmul.f32 %v103, %v866
    %v948 = vmul.f32 %v104, %v866
    %v949 = vmul.f32 %v105, %v866
    %v950 = vmul.f32 %v209, %v877
    %v951 = vmul.f32 %v208, %v877
    %v952 = vmul.f32 %v207, %v877
    %v953 = vmul.f32 %v206, %v877
    %v954 = vmul.f32 %v205, %v877
    %v955 = vmul.f32 %v204, %v877
    %v956 = vmul.f32 %v203, %v877
    %v957 = vmul.f32 %v202, %v877
    %v958 = vmul.f32 %v201, %v877
    %v959 = vmul.f32 %v210, %v877
    %v960 = vadd.f32 %v940, %v950
    %v961 = vadd.f32 %v941, %v951
    %v962 = vadd.f32 %v942, %v952
    %v963 = vadd.f32 %v943, %v953
    %v964 = vadd.f32 %v944, %v954
    %v965 = vadd.f32 %v945, %v955
    %v966 = vadd.f32 %v946, %v956
    %v967 = vadd.f32 %v947, %v957
    %v968 = vadd.f32 %v948, %v958
    %v969 = vadd.f32 %v949, %v959
    %v970 = vmul.f32 %v229, %v898
    %v971 = vmul.f32 %v228, %v898
    %v972 = vmul.f32 %v227, %v898
    %v973 = vmul.f32 %v226, %v898
    %v974 = vmul.f32 %v225, %v898
    %v975 = vmul.f32 %v224, %v898
    %v976 = vmul.f32 %v223, %v898
    %v977 = vmul.f32 %v222, %v898
    %v978 = vmul.f32 %v221, %v898
    %v979 = vmul.f32 %v230, %v898
    %v980 = vadd.f32 %v960, %v970
    %v981 = vadd.f32 %v961, %v971
    %v982 = vadd.f32 %v962, %v972
    %v983 = vadd.f32 %v963, %v973
    %v984 = vadd.f32 %v964, %v974
    %v985 = vadd.f32 %v965, %v975
    %v986 = vadd.f32 %v966, %v976
    %v987 = vadd.f32 %v967, %v977
    %v988 = vadd.f32 %v968, %v978
    %v989 = vadd.f32 %v969, %v979
    %v990 = vmul.f32 %v249, %v919
    %v991 = vmul.f32 %v248, %v919
    %v992 = vmul.f32 %v247, %v919
    %v993 = vmul.f32 %v246, %v919
    %v994 = vmul.f32 %v245, %v919
    %v995 = vmul.f32 %v244, %v919
    %v996 = vmul.f32 %v243, %v919
    %v997 = vmul.f32 %v242, %v919
    %v998 = vmul.f32 %v241, %v919
    %v999 = vmul.f32 %v250, %v919
    %v1000 = vadd.f32 %v980, %v990
    %v1001 = vadd.f32 %v981, %v991
    %v1002 = vadd.f32 %v982, %v992
    %v1003 = vadd.f32 %v983, %v993
    %v1004 = vadd.f32 %v984, %v994
    %v1005 = vadd.f32 %v985, %v995
    %v1006 = vadd.f32 %v986, %v996
    %v1007 = vadd.f32 %v987, %v997
    %v1008 = vadd.f32 %v988, %v998
    %v1009 = vadd.f32 %v989, %v999
    %v1010 = vmax.f32 %v930, %v1000
    %v1011 = vmax.f32 %v931, %v1001
    %v1012 = vmax.f32 %v932, %v1002
    %v1013 = vmax.f32 %v933, %v1003
    %v1014 = vmax.f32 %v934, %v1004
    %v1015 = vmax.f32 %v935, %v1005
    %v1016 = vmax.f32 %v936, %v1006
    %v1017 = vmax.f32 %v937, %v1007
    %v1018 = vmax.f32 %v938, %v1008
    %v1019 = vmax.f32 %v939, %v1009
    %v1020 = vmul.f32 %v106, %v866
    %v1021 = vmul.f32 %v107, %v866
    %v1022 = vmul.f32 %v108, %v866
    %v1023 = vmul.f32 %v109, %v866
    %v1024 = vmul.f32 %v110, %v866
    %v1025 = vmul.f32 %v111, %v866
    %v1026 = vmul.f32 %v112, %v866
    %v1027 = vmul.f32 %v113, %v866
    %v1028 = vmul.f32 %v114, %v866
    %v1029 = vmul.f32 %v115, %v866
    %v1030 = vmul.f32 %v269, %v877
    %v1031 = vmul.f32 %v268, %v877
    %v1032 = vmul.f32 %v267, %v877
    %v1033 = vmul.f32 %v266, %v877
    %v1034 = vmul.f32 %v265, %v877
    %v1035 = vmul.f32 %v264, %v877
    %v1036 = vmul.f32 %v263, %v877
    %v1037 = vmul.f32 %v262, %v877
    %v1038 = vmul.f32 %v261, %v877
    %v1039 = vmul.f32 %v270, %v877
    %v1040 = vadd.f32 %v1020, %v1030
    %v1041 = vadd.f32 %v1021, %v1031
    %v1042 = vadd.f32 %v1022, %v1032
    %v1043 = vadd.f32 %v1023, %v1033
    %v1044 = vadd.f32 %v1024, %v1034
    %v1045 = vadd.f32 %v1025, %v1035
    %v1046 = vadd.f32 %v1026, %v1036
    %v1047 = vadd.f32 %v1027, %v1037
    %v1048 = vadd.f32 %v1028, %v1038
    %v1049 = vadd.f32 %v1029, %v1039
    %v1050 = vmul.f32 %v289, %v898
    %v1051 = vmul.f32 %v288, %v898
    %v1052 = vmul.f32 %v287, %v898
    %v1053 = vmul.f32 %v286, %v898
    %v1054 = vmul.f32 %v285, %v898
    %v1055 = vmul.f32 %v284, %v898
    %v1056 = vmul.f32 %v283, %v898
    %v1057 = vmul.f32 %v282, %v898
    %v1058 = vmul.f32 %v281, %v898
    %v1059 = vmul.f32 %v290, %v898
    %v1060 = vadd.f32 %v1040, %v1050
    %v1061 = vadd.f32 %v1041, %v1051
    %v1062 = vadd.f32 %v1042, %v1052
    %v1063 = vadd.f32 %v1043, %v1053
    %v1064 = vadd.f32 %v1044, %v1054
    %v1065 = vadd.f32 %v1045, %v1055
    %v1066 = vadd.f32 %v1046, %v1056
    %v1067 = vadd.f32 %v1047, %v1057
    %v1068 = vadd.f32 %v1048, %v1058
    %v1069 = vadd.f32 %v1049, %v1059
    %v1070 = vmul.f32 %v309, %v919
    %v1071 = vmul.f32 %v308, %v919
    %v1072 = vmul.f32 %v307, %v919
    %v1073 = vmul.f32 %v306, %v919
    %v1074 = vmul.f32 %v305, %v919
    %v1075 = vmul.f32 %v304, %v919
    %v1076 = vmul.f32 %v303, %v919
    %v1077 = vmul.f32 %v302, %v919
    %v1078 = vmul.f32 %v301, %v919
    %v1079 = vmul.f32 %v310, %v919
    %v1080 = vadd.f32 %v1060, %v1070
    %v1081 = vadd.f32 %v1061, %v1071
    %v1082 = vadd.f32 %v1062, %v1072
    %v1083 = vadd.f32 %v1063, %v1073
    %v1084 = vadd.f32 %v1064, %v1074
    %v1085 = vadd.f32 %v1065, %v1075
    %v1086 = vadd.f32 %v1066, %v1076
    %v1087 = vadd.f32 %v1067, %v1077
    %v1088 = vadd.f32 %v1068, %v1078
    %v1089 = vadd.f32 %v1069, %v1079
    %v1090 = vmax.f32 %v1010, %v1080
    %v1091 = vmax.f32 %v1011, %v1081
    %v1092 = vmax.f32 %v1012, %v1082
    %v1093 = vmax.f32 %v1013, %v1083
    %v1094 = vmax.f32 %v1014, %v1084
    %v1095 = vmax.f32 %v1015, %v1085
    %v1096 = vmax.f32 %v1016, %v1086
    %v1097 = vmax.f32 %v1017, %v1087
    %v1098 = vmax.f32 %v1018, %v1088
    %v1099 = vmax.f32 %v1019, %v1089
    %v1100 = vmul.f32 %v116, %v866
    %v1101 = vmul.f32 %v117, %v866
    %v1102 = vmul.f32 %v118, %v866
    %v1103 = vmul.f32 %v119, %v866
    %v1104 = vmul.f32 %v120, %v866
    %v1105 = vmul.f32 %v121, %v866
    %v1106 = vmul.f32 %v122, %v866
    %v1107 = vmul.f32 %v123, %v866
    %v1108 = vmul.f32 %v124, %v866
    %v1109 = vmul.f32 %v125, %v866
    %v1110 = vmul.f32 %v329, %v877
    %v1111 = vmul.f32 %v328, %v877
    %v1112 = vmul.f32 %v327, %v877
    %v1113 = vmul.f32 %v326, %v877
    %v1114 = vmul.f32 %v325, %v877
    %v1115 = vmul.f32 %v324, %v877
    %v1116 = vmul.f32 %v323, %v877
    %v1117 = vmul.f32 %v322, %v877
    %v1118 = vmul.f32 %v321, %v877
    %v1119 = vmul.f32 %v330, %v877
    %v1120 = vadd.f32 %v1100, %v1110
    %v1121 = vadd.f32 %v1101, %v1111
    %v1122 = vadd.f32 %v1102, %v1112
    %v1123 = vadd.f32 %v1103, %v1113
    %v1124 = vadd.f32 %v1104, %v1114
    %v1125 = vadd.f32 %v1105, %v1115
    %v1126 = vadd.f32 %v1106, %v1116
    %v1127 = vadd.f32 %v1107, %v1117
    %v1128 = vadd.f32 %v1108, %v1118
    %v1129 = vadd.f32 %v1109, %v1119
    %v1130 = vmul.f32 %v349, %v898
    %v1131 = vmul.f32 %v348, %v898
    %v1132 = vmul.f32 %v347, %v898
    %v1133 = vmul.f32 %v346, %v898
    %v1134 = vmul.f32 %v345, %v898
    %v1135 = vmul.f32 %v344, %v898
    %v1136 = vmul.f32 %v343, %v898
    %v1137 = vmul.f32 %v342, %v898
    %v1138 = vmul.f32 %v341, %v898
    %v1139 = vmul.f32 %v350, %v898
    %v1140 = vadd.f32 %v1120, %v1130
    %v1141 = vadd.f32 %v1121, %v1131
    %v1142 = vadd.f32 %v1122, %v1132
    %v1143 = vadd.f32 %v1123, %v1133
    %v1144 = vadd.f32 %v1124, %v1134
    %v1145 = vadd.f32 %v1125, %v1135
    %v1146 = vadd.f32 %v1126, %v1136
    %v1147 = vadd.f32 %v1127, %v1137
    %v1148 = vadd.f32 %v1128, %v1138
    %v1149 = vadd.f32 %v1129, %v1139
    %v1150 = vmul.f32 %v369, %v919
    %v1151 = vmul.f32 %v368, %v919
    %v1152 = vmul.f32 %v367, %v919
    %v1153 = vmul.f32 %v366, %v919
    %v1154 = vmul.f32 %v365, %v919
    %v1155 = vmul.f32 %v364, %v919
    %v1156 = vmul.f32 %v363, %v919
    %v1157 = vmul.f32 %v362, %v919
    %v1158 = vmul.f32 %v361, %v919
    %v1159 = vmul.f32 %v370, %v919
    %v1160 = vadd.f32 %v1140, %v1150
    %v1161 = vadd.f32 %v1141, %v1151
    %v1162 = vadd.f32 %v1142, %v1152
    %v1163 = vadd.f32 %v1143, %v1153
    %v1164 = vadd.f32 %v1144, %v1154
    %v1165 = vadd.f32 %v1145, %v1155
    %v1166 = vadd.f32 %v1146, %v1156
    %v1167 = vadd.f32 %v1147, %v1157
    %v1168 = vadd.f32 %v1148, %v1158
    %v1169 = vadd.f32 %v1149, %v1159
    %v1170 = vmax.f32 %v1090, %v1160
    %v1171 = vmax.f32 %v1091, %v1161
    %v1172 = vmax.f32 %v1092, %v1162
    %v1173 = vmax.f32 %v1093, %v1163
    %v1174 = vmax.f32 %v1094, %v1164
    %v1175 = vmax.f32 %v1095, %v1165
    %v1176 = vmax.f32 %v1096, %v1166
    %v1177 = vmax.f32 %v1097, %v1167
    %v1178 = vmax.f32 %v1098, %v1168
    %v1179 = vmax.f32 %v1099, %v1169
    %v1180 = vrot.slane %v1170, 1
    %v1181 = vrot.slane %v1171, 1
    %v1182 = vrot.slane %v1172, 1
    %v1183 = vrot.slane %v1173, 1
    %v1184 = vrot.slane %v1174, 1
    %v1185 = vrot.slane %v1175, 1
    %v1186 = vrot.slane %v1176, 1
    %v1187 = vrot.slane %v1177, 1
    %v1188 = vrot.slane %v1178, 1
    %v1189 = vrot.slane %v1179, 1
    %v1190 = vsel %vm138, %v1188, %v1189
    %v1191 = vsel %vm138, %v1187, %v1188
    %v1192 = vsel %vm138, %v1186, %v1187
    %v1193 = vsel %vm138, %v1185, %v1186
    %v1194 = vsel %vm138, %v1184, %v1185
    %v1195 = vsel %vm138, %v1183, %v1184
    %v1196 = vsel %vm138, %v1182, %v1183
    %v1197 = vsel %vm138, %v1181, %v1182
    %v1198 = vsel %vm138, %v1180, %v1181
    %v1199 = vsel %vm138, %v1189, %v1180
    %v1200 = vmax.f32 %v1170, %v1198
    %v1201 = vmax.f32 %v1171, %v1197
    %v1202 = vmax.f32 %v1172, %v1196
    %v1203 = vmax.f32 %v1173, %v1195
    %v1204 = vmax.f32 %v1174, %v1194
    %v1205 = vmax.f32 %v1175, %v1193
    %v1206 = vmax.f32 %v1176, %v1192
    %v1207 = vmax.f32 %v1177, %v1191
    %v1208 = vmax.f32 %v1178, %v1190
    %v1209 = vmax.f32 %v1179, %v1199
    %v1210 = vrot.slane %v1170, 2
    %v1211 = vrot.slane %v1171, 2
    %v1212 = vrot.slane %v1172, 2
    %v1213 = vrot.slane %v1173, 2
    %v1214 = vrot.slane %v1174, 2
    %v1215 = vrot.slane %v1175, 2
    %v1216 = vrot.slane %v1176, 2
    %v1217 = vrot.slane %v1177, 2
    %v1218 = vrot.slane %v1178, 2
    %v1219 = vrot.slane %v1179, 2
    %v1220 = vsel %vm159, %v1218, %v1219
    %v1221 = vsel %vm159, %v1217, %v1218
    %v1222 = vsel %vm159, %v1216, %v1217
    %v1223 = vsel %vm159, %v1215, %v1216
    %v1224 = vsel %vm159, %v1214, %v1215
    %v1225 = vsel %vm159, %v1213, %v1214
    %v1226 = vsel %vm159, %v1212, %v1213
    %v1227 = vsel %vm159, %v1211, %v1212
    %v1228 = vsel %vm159, %v1210, %v1211
    %v1229 = vsel %vm159, %v1219, %v1210
    %v1230 = vmax.f32 %v1200, %v1228
    %v1231 = vmax.f32 %v1201, %v1227
    %v1232 = vmax.f32 %v1202, %v1226
    %v1233 = vmax.f32 %v1203, %v1225
    %v1234 = vmax.f32 %v1204, %v1224
    %v1235 = vmax.f32 %v1205, %v1223
    %v1236 = vmax.f32 %v1206, %v1222
    %v1237 = vmax.f32 %v1207, %v1221
    %v1238 = vmax.f32 %v1208, %v1220
    %v1239 = vmax.f32 %v1209, %v1229
    %v1240 = vrot.slane %v1170, 3
    %v1241 = vrot.slane %v1171, 3
    %v1242 = vrot.slane %v1172, 3
    %v1243 = vrot.slane %v1173, 3
    %v1244 = vrot.slane %v1174, 3
    %v1245 = vrot.slane %v1175, 3
    %v1246 = vrot.slane %v1176, 3
    %v1247 = vrot.slane %v1177, 3
    %v1248 = vrot.slane %v1178, 3
    %v1249 = vrot.slane %v1179, 3
    %v1250 = vsel %vm180, %v1248, %v1249
    %v1251 = vsel %vm180, %v1247, %v1248
    %v1252 = vsel %vm180, %v1246, %v1247
    %v1253 = vsel %vm180, %v1245, %v1246
    %v1254 = vsel %vm180, %v1244, %v1245
    %v1255 = vsel %vm180, %v1243, %v1244
    %v1256 = vsel %vm180, %v1242, %v1243
    %v1257 = vsel %vm180, %v1241, %v1242
    %v1258 = vsel %vm180, %v1240, %v1241
    %v1259 = vsel %vm180, %v1249, %v1240
    %v1260 = vmax.f32 %v1230, %v1258
    %v1261 = vmax.f32 %v1231, %v1257
    %v1262 = vmax.f32 %v1232, %v1256
    %v1263 = vmax.f32 %v1233, %v1255
    %v1264 = vmax.f32 %v1234, %v1254
    %v1265 = vmax.f32 %v1235, %v1253
    %v1266 = vmax.f32 %v1236, %v1252
    %v1267 = vmax.f32 %v1237, %v1251
    %v1268 = vmax.f32 %v1238, %v1250
    %v1269 = vmax.f32 %v1239, %v1259
    %s1270 = sld [smem:[#allocation5 + $0x1]]
    %s1271 = ssub.f32 0.0, %s1270
    %v1272 = vstv %s1271
    %v1273 = vmax.f32 %v1260, %v1272
    %v1274 = vmax.f32 %v1261, %v1272
    %v1275 = vmax.f32 %v1262, %v1272
    %v1276 = vmax.f32 %v1263, %v1272
    %v1277 = vmax.f32 %v1264, %v1272
    %v1278 = vmax.f32 %v1265, %v1272
    %v1279 = vmax.f32 %v1266, %v1272
    %v1280 = vmax.f32 %v1267, %v1272
    %v1281 = vmax.f32 %v1268, %v1272
    %v1282 = vmax.f32 %v1269, %v1272
    %s1283 = scalar_lea.vmem %s4, 80
    %v1284 = vld [vmem:[%s1283] sm:$0xff]
    %v1285 = vld [vmem:[%s1283 + $0x8] sm:$0xff]
    %v1286 = vld [vmem:[%s1283 + $0x10] sm:$0xff]
    %v1287 = vld [vmem:[%s1283 + $0x18] sm:$0xff]
    %v1288 = vld [vmem:[%s1283 + $0x20] sm:$0xff]
    %v1289 = vld [vmem:[%s1283 + $0x28] sm:$0xff]
    %v1290 = vld [vmem:[%s1283 + $0x30] sm:$0xff]
    %v1291 = vld [vmem:[%s1283 + $0x38] sm:$0xff]
    %v1292 = vld [vmem:[%s1283 + $0x40] sm:$0xff]
    %v1293 = vld [vmem:[%s1283 + $0x48] sm:$0xff]
    %1295 = vset.pattern.permute.xlu0 0
    %1296 = vperm.xlu0 %1295, %v1284
    %v1297 = vpop.permute.xlu0 %1296
    %1300 = vset.pattern.permute.xlu0 0
    %1301 = vperm.xlu0 %1300, %v1285
    %v1302 = vpop.permute.xlu0 %1301
    %1305 = vset.pattern.permute.xlu0 0
    %1306 = vperm.xlu0 %1305, %v1286
    %v1307 = vpop.permute.xlu0 %1306
    %1310 = vset.pattern.permute.xlu0 0
    %1311 = vperm.xlu0 %1310, %v1287
    %v1312 = vpop.permute.xlu0 %1311
    %1315 = vset.pattern.permute.xlu0 0
    %1316 = vperm.xlu0 %1315, %v1288
    %v1317 = vpop.permute.xlu0 %1316
    %1320 = vset.pattern.permute.xlu0 0
    %1321 = vperm.xlu0 %1320, %v1289
    %v1322 = vpop.permute.xlu0 %1321
    %1325 = vset.pattern.permute.xlu0 0
    %1326 = vperm.xlu0 %1325, %v1290
    %v1327 = vpop.permute.xlu0 %1326
    %1330 = vset.pattern.permute.xlu0 0
    %1331 = vperm.xlu0 %1330, %v1291
    %v1332 = vpop.permute.xlu0 %1331
    %1335 = vset.pattern.permute.xlu0 0
    %1336 = vperm.xlu0 %1335, %v1292
    %v1337 = vpop.permute.xlu0 %1336
    %1340 = vset.pattern.permute.xlu0 0
    %1341 = vperm.xlu0 %1340, %v1293
    %v1342 = vpop.permute.xlu0 %1341
    %v1344 = vmul.f32 %v1273, %v1297
    %v1345 = vmul.f32 %v1274, %v1302
    %v1346 = vmul.f32 %v1275, %v1307
    %v1347 = vmul.f32 %v1276, %v1312
    %v1348 = vmul.f32 %v1277, %v1317
    %v1349 = vmul.f32 %v1278, %v1322
    %v1350 = vmul.f32 %v1279, %v1327
    %v1351 = vmul.f32 %v1280, %v1332
    %v1352 = vmul.f32 %v1281, %v1337
    %v1353 = vmul.f32 %v1282, %v1342
    %v1354 = vadd.f32 %v852, %v1344
    %v1355 = vadd.f32 %v853, %v1345
    %v1356 = vadd.f32 %v854, %v1346
    %v1357 = vadd.f32 %v855, %v1347
    %v1358 = vadd.f32 %v856, %v1348
    %v1359 = vadd.f32 %v857, %v1349
    %v1360 = vadd.f32 %v858, %v1350
    %v1361 = vadd.f32 %v859, %v1351
    %v1362 = vadd.f32 %v860, %v1352
    %v1363 = vadd.f32 %v861, %v1353
    %s1364 = sld [smem:[#allocation3 + $0x100]]
    %s1365 = sld [smem:[#allocation3 + $0x101]]
    %s1366 = sld [smem:[#allocation3 + $0x102]]
    %s1367 = sld [smem:[#allocation3 + $0x103]]
    %v1368 = vstv %s1364
    %v1369 = vmul.f32 %v86, %v1368
    %v1370 = vmul.f32 %v87, %v1368
    %v1371 = vmul.f32 %v88, %v1368
    %v1372 = vmul.f32 %v89, %v1368
    %v1373 = vmul.f32 %v90, %v1368
    %v1374 = vmul.f32 %v91, %v1368
    %v1375 = vmul.f32 %v92, %v1368
    %v1376 = vmul.f32 %v93, %v1368
    %v1377 = vmul.f32 %v94, %v1368
    %v1378 = vmul.f32 %v95, %v1368
    %v1379 = vstv %s1365
    %v1380 = vmul.f32 %v147, %v1379
    %v1381 = vmul.f32 %v146, %v1379
    %v1382 = vmul.f32 %v145, %v1379
    %v1383 = vmul.f32 %v144, %v1379
    %v1384 = vmul.f32 %v143, %v1379
    %v1385 = vmul.f32 %v142, %v1379
    %v1386 = vmul.f32 %v141, %v1379
    %v1387 = vmul.f32 %v140, %v1379
    %v1388 = vmul.f32 %v139, %v1379
    %v1389 = vmul.f32 %v148, %v1379
    %v1390 = vadd.f32 %v1369, %v1380
    %v1391 = vadd.f32 %v1370, %v1381
    %v1392 = vadd.f32 %v1371, %v1382
    %v1393 = vadd.f32 %v1372, %v1383
    %v1394 = vadd.f32 %v1373, %v1384
    %v1395 = vadd.f32 %v1374, %v1385
    %v1396 = vadd.f32 %v1375, %v1386
    %v1397 = vadd.f32 %v1376, %v1387
    %v1398 = vadd.f32 %v1377, %v1388
    %v1399 = vadd.f32 %v1378, %v1389
    %v1400 = vstv %s1366
    %v1401 = vmul.f32 %v168, %v1400
    %v1402 = vmul.f32 %v167, %v1400
    %v1403 = vmul.f32 %v166, %v1400
    %v1404 = vmul.f32 %v165, %v1400
    %v1405 = vmul.f32 %v164, %v1400
    %v1406 = vmul.f32 %v163, %v1400
    %v1407 = vmul.f32 %v162, %v1400
    %v1408 = vmul.f32 %v161, %v1400
    %v1409 = vmul.f32 %v160, %v1400
    %v1410 = vmul.f32 %v169, %v1400
    %v1411 = vadd.f32 %v1390, %v1401
    %v1412 = vadd.f32 %v1391, %v1402
    %v1413 = vadd.f32 %v1392, %v1403
    %v1414 = vadd.f32 %v1393, %v1404
    %v1415 = vadd.f32 %v1394, %v1405
    %v1416 = vadd.f32 %v1395, %v1406
    %v1417 = vadd.f32 %v1396, %v1407
    %v1418 = vadd.f32 %v1397, %v1408
    %v1419 = vadd.f32 %v1398, %v1409
    %v1420 = vadd.f32 %v1399, %v1410
    %v1421 = vstv %s1367
    %v1422 = vmul.f32 %v189, %v1421
    %v1423 = vmul.f32 %v188, %v1421
    %v1424 = vmul.f32 %v187, %v1421
    %v1425 = vmul.f32 %v186, %v1421
    %v1426 = vmul.f32 %v185, %v1421
    %v1427 = vmul.f32 %v184, %v1421
    %v1428 = vmul.f32 %v183, %v1421
    %v1429 = vmul.f32 %v182, %v1421
    %v1430 = vmul.f32 %v181, %v1421
    %v1431 = vmul.f32 %v190, %v1421
    %v1432 = vadd.f32 %v1411, %v1422
    %v1433 = vadd.f32 %v1412, %v1423
    %v1434 = vadd.f32 %v1413, %v1424
    %v1435 = vadd.f32 %v1414, %v1425
    %v1436 = vadd.f32 %v1415, %v1426
    %v1437 = vadd.f32 %v1416, %v1427
    %v1438 = vadd.f32 %v1417, %v1428
    %v1439 = vadd.f32 %v1418, %v1429
    %v1440 = vadd.f32 %v1419, %v1430
    %v1441 = vadd.f32 %v1420, %v1431
    %v1442 = vmul.f32 %v96, %v1368
    %v1443 = vmul.f32 %v97, %v1368
    %v1444 = vmul.f32 %v98, %v1368
    %v1445 = vmul.f32 %v99, %v1368
    %v1446 = vmul.f32 %v100, %v1368
    %v1447 = vmul.f32 %v101, %v1368
    %v1448 = vmul.f32 %v102, %v1368
    %v1449 = vmul.f32 %v103, %v1368
    %v1450 = vmul.f32 %v104, %v1368
    %v1451 = vmul.f32 %v105, %v1368
    %v1452 = vmul.f32 %v209, %v1379
    %v1453 = vmul.f32 %v208, %v1379
    %v1454 = vmul.f32 %v207, %v1379
    %v1455 = vmul.f32 %v206, %v1379
    %v1456 = vmul.f32 %v205, %v1379
    %v1457 = vmul.f32 %v204, %v1379
    %v1458 = vmul.f32 %v203, %v1379
    %v1459 = vmul.f32 %v202, %v1379
    %v1460 = vmul.f32 %v201, %v1379
    %v1461 = vmul.f32 %v210, %v1379
    %v1462 = vadd.f32 %v1442, %v1452
    %v1463 = vadd.f32 %v1443, %v1453
    %v1464 = vadd.f32 %v1444, %v1454
    %v1465 = vadd.f32 %v1445, %v1455
    %v1466 = vadd.f32 %v1446, %v1456
    %v1467 = vadd.f32 %v1447, %v1457
    %v1468 = vadd.f32 %v1448, %v1458
    %v1469 = vadd.f32 %v1449, %v1459
    %v1470 = vadd.f32 %v1450, %v1460
    %v1471 = vadd.f32 %v1451, %v1461
    %v1472 = vmul.f32 %v229, %v1400
    %v1473 = vmul.f32 %v228, %v1400
    %v1474 = vmul.f32 %v227, %v1400
    %v1475 = vmul.f32 %v226, %v1400
    %v1476 = vmul.f32 %v225, %v1400
    %v1477 = vmul.f32 %v224, %v1400
    %v1478 = vmul.f32 %v223, %v1400
    %v1479 = vmul.f32 %v222, %v1400
    %v1480 = vmul.f32 %v221, %v1400
    %v1481 = vmul.f32 %v230, %v1400
    %v1482 = vadd.f32 %v1462, %v1472
    %v1483 = vadd.f32 %v1463, %v1473
    %v1484 = vadd.f32 %v1464, %v1474
    %v1485 = vadd.f32 %v1465, %v1475
    %v1486 = vadd.f32 %v1466, %v1476
    %v1487 = vadd.f32 %v1467, %v1477
    %v1488 = vadd.f32 %v1468, %v1478
    %v1489 = vadd.f32 %v1469, %v1479
    %v1490 = vadd.f32 %v1470, %v1480
    %v1491 = vadd.f32 %v1471, %v1481
    %v1492 = vmul.f32 %v249, %v1421
    %v1493 = vmul.f32 %v248, %v1421
    %v1494 = vmul.f32 %v247, %v1421
    %v1495 = vmul.f32 %v246, %v1421
    %v1496 = vmul.f32 %v245, %v1421
    %v1497 = vmul.f32 %v244, %v1421
    %v1498 = vmul.f32 %v243, %v1421
    %v1499 = vmul.f32 %v242, %v1421
    %v1500 = vmul.f32 %v241, %v1421
    %v1501 = vmul.f32 %v250, %v1421
    %v1502 = vadd.f32 %v1482, %v1492
    %v1503 = vadd.f32 %v1483, %v1493
    %v1504 = vadd.f32 %v1484, %v1494
    %v1505 = vadd.f32 %v1485, %v1495
    %v1506 = vadd.f32 %v1486, %v1496
    %v1507 = vadd.f32 %v1487, %v1497
    %v1508 = vadd.f32 %v1488, %v1498
    %v1509 = vadd.f32 %v1489, %v1499
    %v1510 = vadd.f32 %v1490, %v1500
    %v1511 = vadd.f32 %v1491, %v1501
    %v1512 = vmax.f32 %v1432, %v1502
    %v1513 = vmax.f32 %v1433, %v1503
    %v1514 = vmax.f32 %v1434, %v1504
    %v1515 = vmax.f32 %v1435, %v1505
    %v1516 = vmax.f32 %v1436, %v1506
    %v1517 = vmax.f32 %v1437, %v1507
    %v1518 = vmax.f32 %v1438, %v1508
    %v1519 = vmax.f32 %v1439, %v1509
    %v1520 = vmax.f32 %v1440, %v1510
    %v1521 = vmax.f32 %v1441, %v1511
    %v1522 = vmul.f32 %v106, %v1368
    %v1523 = vmul.f32 %v107, %v1368
    %v1524 = vmul.f32 %v108, %v1368
    %v1525 = vmul.f32 %v109, %v1368
    %v1526 = vmul.f32 %v110, %v1368
    %v1527 = vmul.f32 %v111, %v1368
    %v1528 = vmul.f32 %v112, %v1368
    %v1529 = vmul.f32 %v113, %v1368
    %v1530 = vmul.f32 %v114, %v1368
    %v1531 = vmul.f32 %v115, %v1368
    %v1532 = vmul.f32 %v269, %v1379
    %v1533 = vmul.f32 %v268, %v1379
    %v1534 = vmul.f32 %v267, %v1379
    %v1535 = vmul.f32 %v266, %v1379
    %v1536 = vmul.f32 %v265, %v1379
    %v1537 = vmul.f32 %v264, %v1379
    %v1538 = vmul.f32 %v263, %v1379
    %v1539 = vmul.f32 %v262, %v1379
    %v1540 = vmul.f32 %v261, %v1379
    %v1541 = vmul.f32 %v270, %v1379
    %v1542 = vadd.f32 %v1522, %v1532
    %v1543 = vadd.f32 %v1523, %v1533
    %v1544 = vadd.f32 %v1524, %v1534
    %v1545 = vadd.f32 %v1525, %v1535
    %v1546 = vadd.f32 %v1526, %v1536
    %v1547 = vadd.f32 %v1527, %v1537
    %v1548 = vadd.f32 %v1528, %v1538
    %v1549 = vadd.f32 %v1529, %v1539
    %v1550 = vadd.f32 %v1530, %v1540
    %v1551 = vadd.f32 %v1531, %v1541
    %v1552 = vmul.f32 %v289, %v1400
    %v1553 = vmul.f32 %v288, %v1400
    %v1554 = vmul.f32 %v287, %v1400
    %v1555 = vmul.f32 %v286, %v1400
    %v1556 = vmul.f32 %v285, %v1400
    %v1557 = vmul.f32 %v284, %v1400
    %v1558 = vmul.f32 %v283, %v1400
    %v1559 = vmul.f32 %v282, %v1400
    %v1560 = vmul.f32 %v281, %v1400
    %v1561 = vmul.f32 %v290, %v1400
    %v1562 = vadd.f32 %v1542, %v1552
    %v1563 = vadd.f32 %v1543, %v1553
    %v1564 = vadd.f32 %v1544, %v1554
    %v1565 = vadd.f32 %v1545, %v1555
    %v1566 = vadd.f32 %v1546, %v1556
    %v1567 = vadd.f32 %v1547, %v1557
    %v1568 = vadd.f32 %v1548, %v1558
    %v1569 = vadd.f32 %v1549, %v1559
    %v1570 = vadd.f32 %v1550, %v1560
    %v1571 = vadd.f32 %v1551, %v1561
    %v1572 = vmul.f32 %v309, %v1421
    %v1573 = vmul.f32 %v308, %v1421
    %v1574 = vmul.f32 %v307, %v1421
    %v1575 = vmul.f32 %v306, %v1421
    %v1576 = vmul.f32 %v305, %v1421
    %v1577 = vmul.f32 %v304, %v1421
    %v1578 = vmul.f32 %v303, %v1421
    %v1579 = vmul.f32 %v302, %v1421
    %v1580 = vmul.f32 %v301, %v1421
    %v1581 = vmul.f32 %v310, %v1421
    %v1582 = vadd.f32 %v1562, %v1572
    %v1583 = vadd.f32 %v1563, %v1573
    %v1584 = vadd.f32 %v1564, %v1574
    %v1585 = vadd.f32 %v1565, %v1575
    %v1586 = vadd.f32 %v1566, %v1576
    %v1587 = vadd.f32 %v1567, %v1577
    %v1588 = vadd.f32 %v1568, %v1578
    %v1589 = vadd.f32 %v1569, %v1579
    %v1590 = vadd.f32 %v1570, %v1580
    %v1591 = vadd.f32 %v1571, %v1581
    %v1592 = vmax.f32 %v1512, %v1582
    %v1593 = vmax.f32 %v1513, %v1583
    %v1594 = vmax.f32 %v1514, %v1584
    %v1595 = vmax.f32 %v1515, %v1585
    %v1596 = vmax.f32 %v1516, %v1586
    %v1597 = vmax.f32 %v1517, %v1587
    %v1598 = vmax.f32 %v1518, %v1588
    %v1599 = vmax.f32 %v1519, %v1589
    %v1600 = vmax.f32 %v1520, %v1590
    %v1601 = vmax.f32 %v1521, %v1591
    %v1602 = vmul.f32 %v116, %v1368
    %v1603 = vmul.f32 %v117, %v1368
    %v1604 = vmul.f32 %v118, %v1368
    %v1605 = vmul.f32 %v119, %v1368
    %v1606 = vmul.f32 %v120, %v1368
    %v1607 = vmul.f32 %v121, %v1368
    %v1608 = vmul.f32 %v122, %v1368
    %v1609 = vmul.f32 %v123, %v1368
    %v1610 = vmul.f32 %v124, %v1368
    %v1611 = vmul.f32 %v125, %v1368
    %v1612 = vmul.f32 %v329, %v1379
    %v1613 = vmul.f32 %v328, %v1379
    %v1614 = vmul.f32 %v327, %v1379
    %v1615 = vmul.f32 %v326, %v1379
    %v1616 = vmul.f32 %v325, %v1379
    %v1617 = vmul.f32 %v324, %v1379
    %v1618 = vmul.f32 %v323, %v1379
    %v1619 = vmul.f32 %v322, %v1379
    %v1620 = vmul.f32 %v321, %v1379
    %v1621 = vmul.f32 %v330, %v1379
    %v1622 = vadd.f32 %v1602, %v1612
    %v1623 = vadd.f32 %v1603, %v1613
    %v1624 = vadd.f32 %v1604, %v1614
    %v1625 = vadd.f32 %v1605, %v1615
    %v1626 = vadd.f32 %v1606, %v1616
    %v1627 = vadd.f32 %v1607, %v1617
    %v1628 = vadd.f32 %v1608, %v1618
    %v1629 = vadd.f32 %v1609, %v1619
    %v1630 = vadd.f32 %v1610, %v1620
    %v1631 = vadd.f32 %v1611, %v1621
    %v1632 = vmul.f32 %v349, %v1400
    %v1633 = vmul.f32 %v348, %v1400
    %v1634 = vmul.f32 %v347, %v1400
    %v1635 = vmul.f32 %v346, %v1400
    %v1636 = vmul.f32 %v345, %v1400
    %v1637 = vmul.f32 %v344, %v1400
    %v1638 = vmul.f32 %v343, %v1400
    %v1639 = vmul.f32 %v342, %v1400
    %v1640 = vmul.f32 %v341, %v1400
    %v1641 = vmul.f32 %v350, %v1400
    %v1642 = vadd.f32 %v1622, %v1632
    %v1643 = vadd.f32 %v1623, %v1633
    %v1644 = vadd.f32 %v1624, %v1634
    %v1645 = vadd.f32 %v1625, %v1635
    %v1646 = vadd.f32 %v1626, %v1636
    %v1647 = vadd.f32 %v1627, %v1637
    %v1648 = vadd.f32 %v1628, %v1638
    %v1649 = vadd.f32 %v1629, %v1639
    %v1650 = vadd.f32 %v1630, %v1640
    %v1651 = vadd.f32 %v1631, %v1641
    %v1652 = vmul.f32 %v369, %v1421
    %v1653 = vmul.f32 %v368, %v1421
    %v1654 = vmul.f32 %v367, %v1421
    %v1655 = vmul.f32 %v366, %v1421
    %v1656 = vmul.f32 %v365, %v1421
    %v1657 = vmul.f32 %v364, %v1421
    %v1658 = vmul.f32 %v363, %v1421
    %v1659 = vmul.f32 %v362, %v1421
    %v1660 = vmul.f32 %v361, %v1421
    %v1661 = vmul.f32 %v370, %v1421
    %v1662 = vadd.f32 %v1642, %v1652
    %v1663 = vadd.f32 %v1643, %v1653
    %v1664 = vadd.f32 %v1644, %v1654
    %v1665 = vadd.f32 %v1645, %v1655
    %v1666 = vadd.f32 %v1646, %v1656
    %v1667 = vadd.f32 %v1647, %v1657
    %v1668 = vadd.f32 %v1648, %v1658
    %v1669 = vadd.f32 %v1649, %v1659
    %v1670 = vadd.f32 %v1650, %v1660
    %v1671 = vadd.f32 %v1651, %v1661
    %v1672 = vmax.f32 %v1592, %v1662
    %v1673 = vmax.f32 %v1593, %v1663
    %v1674 = vmax.f32 %v1594, %v1664
    %v1675 = vmax.f32 %v1595, %v1665
    %v1676 = vmax.f32 %v1596, %v1666
    %v1677 = vmax.f32 %v1597, %v1667
    %v1678 = vmax.f32 %v1598, %v1668
    %v1679 = vmax.f32 %v1599, %v1669
    %v1680 = vmax.f32 %v1600, %v1670
    %v1681 = vmax.f32 %v1601, %v1671
    %v1682 = vrot.slane %v1672, 1
    %v1683 = vrot.slane %v1673, 1
    %v1684 = vrot.slane %v1674, 1
    %v1685 = vrot.slane %v1675, 1
    %v1686 = vrot.slane %v1676, 1
    %v1687 = vrot.slane %v1677, 1
    %v1688 = vrot.slane %v1678, 1
    %v1689 = vrot.slane %v1679, 1
    %v1690 = vrot.slane %v1680, 1
    %v1691 = vrot.slane %v1681, 1
    %v1692 = vsel %vm138, %v1690, %v1691
    %v1693 = vsel %vm138, %v1689, %v1690
    %v1694 = vsel %vm138, %v1688, %v1689
    %v1695 = vsel %vm138, %v1687, %v1688
    %v1696 = vsel %vm138, %v1686, %v1687
    %v1697 = vsel %vm138, %v1685, %v1686
    %v1698 = vsel %vm138, %v1684, %v1685
    %v1699 = vsel %vm138, %v1683, %v1684
    %v1700 = vsel %vm138, %v1682, %v1683
    %v1701 = vsel %vm138, %v1691, %v1682
    %v1702 = vmax.f32 %v1672, %v1700
    %v1703 = vmax.f32 %v1673, %v1699
    %v1704 = vmax.f32 %v1674, %v1698
    %v1705 = vmax.f32 %v1675, %v1697
    %v1706 = vmax.f32 %v1676, %v1696
    %v1707 = vmax.f32 %v1677, %v1695
    %v1708 = vmax.f32 %v1678, %v1694
    %v1709 = vmax.f32 %v1679, %v1693
    %v1710 = vmax.f32 %v1680, %v1692
    %v1711 = vmax.f32 %v1681, %v1701
    %v1712 = vrot.slane %v1672, 2
    %v1713 = vrot.slane %v1673, 2
    %v1714 = vrot.slane %v1674, 2
    %v1715 = vrot.slane %v1675, 2
    %v1716 = vrot.slane %v1676, 2
    %v1717 = vrot.slane %v1677, 2
    %v1718 = vrot.slane %v1678, 2
    %v1719 = vrot.slane %v1679, 2
    %v1720 = vrot.slane %v1680, 2
    %v1721 = vrot.slane %v1681, 2
    %v1722 = vsel %vm159, %v1720, %v1721
    %v1723 = vsel %vm159, %v1719, %v1720
    %v1724 = vsel %vm159, %v1718, %v1719
    %v1725 = vsel %vm159, %v1717, %v1718
    %v1726 = vsel %vm159, %v1716, %v1717
    %v1727 = vsel %vm159, %v1715, %v1716
    %v1728 = vsel %vm159, %v1714, %v1715
    %v1729 = vsel %vm159, %v1713, %v1714
    %v1730 = vsel %vm159, %v1712, %v1713
    %v1731 = vsel %vm159, %v1721, %v1712
    %v1732 = vmax.f32 %v1702, %v1730
    %v1733 = vmax.f32 %v1703, %v1729
    %v1734 = vmax.f32 %v1704, %v1728
    %v1735 = vmax.f32 %v1705, %v1727
    %v1736 = vmax.f32 %v1706, %v1726
    %v1737 = vmax.f32 %v1707, %v1725
    %v1738 = vmax.f32 %v1708, %v1724
    %v1739 = vmax.f32 %v1709, %v1723
    %v1740 = vmax.f32 %v1710, %v1722
    %v1741 = vmax.f32 %v1711, %v1731
    %v1742 = vrot.slane %v1672, 3
    %v1743 = vrot.slane %v1673, 3
    %v1744 = vrot.slane %v1674, 3
    %v1745 = vrot.slane %v1675, 3
    %v1746 = vrot.slane %v1676, 3
    %v1747 = vrot.slane %v1677, 3
    %v1748 = vrot.slane %v1678, 3
    %v1749 = vrot.slane %v1679, 3
    %v1750 = vrot.slane %v1680, 3
    %v1751 = vrot.slane %v1681, 3
    %v1752 = vsel %vm180, %v1750, %v1751
    %v1753 = vsel %vm180, %v1749, %v1750
    %v1754 = vsel %vm180, %v1748, %v1749
    %v1755 = vsel %vm180, %v1747, %v1748
    %v1756 = vsel %vm180, %v1746, %v1747
    %v1757 = vsel %vm180, %v1745, %v1746
    %v1758 = vsel %vm180, %v1744, %v1745
    %v1759 = vsel %vm180, %v1743, %v1744
    %v1760 = vsel %vm180, %v1742, %v1743
    %v1761 = vsel %vm180, %v1751, %v1742
    %v1762 = vmax.f32 %v1732, %v1760
    %v1763 = vmax.f32 %v1733, %v1759
    %v1764 = vmax.f32 %v1734, %v1758
    %v1765 = vmax.f32 %v1735, %v1757
    %v1766 = vmax.f32 %v1736, %v1756
    %v1767 = vmax.f32 %v1737, %v1755
    %v1768 = vmax.f32 %v1738, %v1754
    %v1769 = vmax.f32 %v1739, %v1753
    %v1770 = vmax.f32 %v1740, %v1752
    %v1771 = vmax.f32 %v1741, %v1761
    %s1772 = sld [smem:[#allocation5 + $0x2]]
    %s1773 = ssub.f32 0.0, %s1772
    %v1774 = vstv %s1773
    %v1775 = vmax.f32 %v1762, %v1774
    %v1776 = vmax.f32 %v1763, %v1774
    %v1777 = vmax.f32 %v1764, %v1774
    %v1778 = vmax.f32 %v1765, %v1774
    %v1779 = vmax.f32 %v1766, %v1774
    %v1780 = vmax.f32 %v1767, %v1774
    %v1781 = vmax.f32 %v1768, %v1774
    %v1782 = vmax.f32 %v1769, %v1774
    %v1783 = vmax.f32 %v1770, %v1774
    %v1784 = vmax.f32 %v1771, %v1774
    %s1785 = scalar_lea.vmem %s4, 160
    %v1786 = vld [vmem:[%s1785] sm:$0xff]
    %v1787 = vld [vmem:[%s1785 + $0x8] sm:$0xff]
    %v1788 = vld [vmem:[%s1785 + $0x10] sm:$0xff]
    %v1789 = vld [vmem:[%s1785 + $0x18] sm:$0xff]
    %v1790 = vld [vmem:[%s1785 + $0x20] sm:$0xff]
    %v1791 = vld [vmem:[%s1785 + $0x28] sm:$0xff]
    %v1792 = vld [vmem:[%s1785 + $0x30] sm:$0xff]
    %v1793 = vld [vmem:[%s1785 + $0x38] sm:$0xff]
    %v1794 = vld [vmem:[%s1785 + $0x40] sm:$0xff]
    %v1795 = vld [vmem:[%s1785 + $0x48] sm:$0xff]
    %1797 = vset.pattern.permute.xlu0 0
    %1798 = vperm.xlu0 %1797, %v1786
    %v1799 = vpop.permute.xlu0 %1798
    %1802 = vset.pattern.permute.xlu0 0
    %1803 = vperm.xlu0 %1802, %v1787
    %v1804 = vpop.permute.xlu0 %1803
    %1807 = vset.pattern.permute.xlu0 0
    %1808 = vperm.xlu0 %1807, %v1788
    %v1809 = vpop.permute.xlu0 %1808
    %1812 = vset.pattern.permute.xlu0 0
    %1813 = vperm.xlu0 %1812, %v1789
    %v1814 = vpop.permute.xlu0 %1813
    %1817 = vset.pattern.permute.xlu0 0
    %1818 = vperm.xlu0 %1817, %v1790
    %v1819 = vpop.permute.xlu0 %1818
    %1822 = vset.pattern.permute.xlu0 0
    %1823 = vperm.xlu0 %1822, %v1791
    %v1824 = vpop.permute.xlu0 %1823
    %1827 = vset.pattern.permute.xlu0 0
    %1828 = vperm.xlu0 %1827, %v1792
    %v1829 = vpop.permute.xlu0 %1828
    %1832 = vset.pattern.permute.xlu0 0
    %1833 = vperm.xlu0 %1832, %v1793
    %v1834 = vpop.permute.xlu0 %1833
    %1837 = vset.pattern.permute.xlu0 0
    %1838 = vperm.xlu0 %1837, %v1794
    %v1839 = vpop.permute.xlu0 %1838
    %1842 = vset.pattern.permute.xlu0 0
    %1843 = vperm.xlu0 %1842, %v1795
    %v1844 = vpop.permute.xlu0 %1843
    %v1846 = vmul.f32 %v1775, %v1799
    %v1847 = vmul.f32 %v1776, %v1804
    %v1848 = vmul.f32 %v1777, %v1809
    %v1849 = vmul.f32 %v1778, %v1814
    %v1850 = vmul.f32 %v1779, %v1819
    %v1851 = vmul.f32 %v1780, %v1824
    %v1852 = vmul.f32 %v1781, %v1829
    %v1853 = vmul.f32 %v1782, %v1834
    %v1854 = vmul.f32 %v1783, %v1839
    %v1855 = vmul.f32 %v1784, %v1844
    %v1856 = vadd.f32 %v1354, %v1846
    %v1857 = vadd.f32 %v1355, %v1847
    %v1858 = vadd.f32 %v1356, %v1848
    %v1859 = vadd.f32 %v1357, %v1849
    %v1860 = vadd.f32 %v1358, %v1850
    %v1861 = vadd.f32 %v1359, %v1851
    %v1862 = vadd.f32 %v1360, %v1852
    %v1863 = vadd.f32 %v1361, %v1853
    %v1864 = vadd.f32 %v1362, %v1854
    %v1865 = vadd.f32 %v1363, %v1855
    %s1866 = sld [smem:[#allocation3 + $0x180]]
    %s1867 = sld [smem:[#allocation3 + $0x181]]
    %s1868 = sld [smem:[#allocation3 + $0x182]]
    %s1869 = sld [smem:[#allocation3 + $0x183]]
    %v1870 = vstv %s1866
    %v1871 = vmul.f32 %v86, %v1870
    %v1872 = vmul.f32 %v87, %v1870
    %v1873 = vmul.f32 %v88, %v1870
    %v1874 = vmul.f32 %v89, %v1870
    %v1875 = vmul.f32 %v90, %v1870
    %v1876 = vmul.f32 %v91, %v1870
    %v1877 = vmul.f32 %v92, %v1870
    %v1878 = vmul.f32 %v93, %v1870
    %v1879 = vmul.f32 %v94, %v1870
    %v1880 = vmul.f32 %v95, %v1870
    %v1881 = vstv %s1867
    %v1882 = vmul.f32 %v147, %v1881
    %v1883 = vmul.f32 %v146, %v1881
    %v1884 = vmul.f32 %v145, %v1881
    %v1885 = vmul.f32 %v144, %v1881
    %v1886 = vmul.f32 %v143, %v1881
    %v1887 = vmul.f32 %v142, %v1881
    %v1888 = vmul.f32 %v141, %v1881
    %v1889 = vmul.f32 %v140, %v1881
    %v1890 = vmul.f32 %v139, %v1881
    %v1891 = vmul.f32 %v148, %v1881
    %v1892 = vadd.f32 %v1871, %v1882
    %v1893 = vadd.f32 %v1872, %v1883
    %v1894 = vadd.f32 %v1873, %v1884
    %v1895 = vadd.f32 %v1874, %v1885
    %v1896 = vadd.f32 %v1875, %v1886
    %v1897 = vadd.f32 %v1876, %v1887
    %v1898 = vadd.f32 %v1877, %v1888
    %v1899 = vadd.f32 %v1878, %v1889
    %v1900 = vadd.f32 %v1879, %v1890
    %v1901 = vadd.f32 %v1880, %v1891
    %v1902 = vstv %s1868
    %v1903 = vmul.f32 %v168, %v1902
    %v1904 = vmul.f32 %v167, %v1902
    %v1905 = vmul.f32 %v166, %v1902
    %v1906 = vmul.f32 %v165, %v1902
    %v1907 = vmul.f32 %v164, %v1902
    %v1908 = vmul.f32 %v163, %v1902
    %v1909 = vmul.f32 %v162, %v1902
    %v1910 = vmul.f32 %v161, %v1902
    %v1911 = vmul.f32 %v160, %v1902
    %v1912 = vmul.f32 %v169, %v1902
    %v1913 = vadd.f32 %v1892, %v1903
    %v1914 = vadd.f32 %v1893, %v1904
    %v1915 = vadd.f32 %v1894, %v1905
    %v1916 = vadd.f32 %v1895, %v1906
    %v1917 = vadd.f32 %v1896, %v1907
    %v1918 = vadd.f32 %v1897, %v1908
    %v1919 = vadd.f32 %v1898, %v1909
    %v1920 = vadd.f32 %v1899, %v1910
    %v1921 = vadd.f32 %v1900, %v1911
    %v1922 = vadd.f32 %v1901, %v1912
    %v1923 = vstv %s1869
    %v1924 = vmul.f32 %v189, %v1923
    %v1925 = vmul.f32 %v188, %v1923
    %v1926 = vmul.f32 %v187, %v1923
    %v1927 = vmul.f32 %v186, %v1923
    %v1928 = vmul.f32 %v185, %v1923
    %v1929 = vmul.f32 %v184, %v1923
    %v1930 = vmul.f32 %v183, %v1923
    %v1931 = vmul.f32 %v182, %v1923
    %v1932 = vmul.f32 %v181, %v1923
    %v1933 = vmul.f32 %v190, %v1923
    %v1934 = vadd.f32 %v1913, %v1924
    %v1935 = vadd.f32 %v1914, %v1925
    %v1936 = vadd.f32 %v1915, %v1926
    %v1937 = vadd.f32 %v1916, %v1927
    %v1938 = vadd.f32 %v1917, %v1928
    %v1939 = vadd.f32 %v1918, %v1929
    %v1940 = vadd.f32 %v1919, %v1930
    %v1941 = vadd.f32 %v1920, %v1931
    %v1942 = vadd.f32 %v1921, %v1932
    %v1943 = vadd.f32 %v1922, %v1933
    %v1944 = vmul.f32 %v96, %v1870
    %v1945 = vmul.f32 %v97, %v1870
    %v1946 = vmul.f32 %v98, %v1870
    %v1947 = vmul.f32 %v99, %v1870
    %v1948 = vmul.f32 %v100, %v1870
    %v1949 = vmul.f32 %v101, %v1870
    %v1950 = vmul.f32 %v102, %v1870
    %v1951 = vmul.f32 %v103, %v1870
    %v1952 = vmul.f32 %v104, %v1870
    %v1953 = vmul.f32 %v105, %v1870
    %v1954 = vmul.f32 %v209, %v1881
    %v1955 = vmul.f32 %v208, %v1881
    %v1956 = vmul.f32 %v207, %v1881
    %v1957 = vmul.f32 %v206, %v1881
    %v1958 = vmul.f32 %v205, %v1881
    %v1959 = vmul.f32 %v204, %v1881
    %v1960 = vmul.f32 %v203, %v1881
    %v1961 = vmul.f32 %v202, %v1881
    %v1962 = vmul.f32 %v201, %v1881
    %v1963 = vmul.f32 %v210, %v1881
    %v1964 = vadd.f32 %v1944, %v1954
    %v1965 = vadd.f32 %v1945, %v1955
    %v1966 = vadd.f32 %v1946, %v1956
    %v1967 = vadd.f32 %v1947, %v1957
    %v1968 = vadd.f32 %v1948, %v1958
    %v1969 = vadd.f32 %v1949, %v1959
    %v1970 = vadd.f32 %v1950, %v1960
    %v1971 = vadd.f32 %v1951, %v1961
    %v1972 = vadd.f32 %v1952, %v1962
    %v1973 = vadd.f32 %v1953, %v1963
    %v1974 = vmul.f32 %v229, %v1902
    %v1975 = vmul.f32 %v228, %v1902
    %v1976 = vmul.f32 %v227, %v1902
    %v1977 = vmul.f32 %v226, %v1902
    %v1978 = vmul.f32 %v225, %v1902
    %v1979 = vmul.f32 %v224, %v1902
    %v1980 = vmul.f32 %v223, %v1902
    %v1981 = vmul.f32 %v222, %v1902
    %v1982 = vmul.f32 %v221, %v1902
    %v1983 = vmul.f32 %v230, %v1902
    %v1984 = vadd.f32 %v1964, %v1974
    %v1985 = vadd.f32 %v1965, %v1975
    %v1986 = vadd.f32 %v1966, %v1976
    %v1987 = vadd.f32 %v1967, %v1977
    %v1988 = vadd.f32 %v1968, %v1978
    %v1989 = vadd.f32 %v1969, %v1979
    %v1990 = vadd.f32 %v1970, %v1980
    %v1991 = vadd.f32 %v1971, %v1981
    %v1992 = vadd.f32 %v1972, %v1982
    %v1993 = vadd.f32 %v1973, %v1983
    %v1994 = vmul.f32 %v249, %v1923
    %v1995 = vmul.f32 %v248, %v1923
    %v1996 = vmul.f32 %v247, %v1923
    %v1997 = vmul.f32 %v246, %v1923
    %v1998 = vmul.f32 %v245, %v1923
    %v1999 = vmul.f32 %v244, %v1923
    %v2000 = vmul.f32 %v243, %v1923
    %v2001 = vmul.f32 %v242, %v1923
    %v2002 = vmul.f32 %v241, %v1923
    %v2003 = vmul.f32 %v250, %v1923
    %v2004 = vadd.f32 %v1984, %v1994
    %v2005 = vadd.f32 %v1985, %v1995
    %v2006 = vadd.f32 %v1986, %v1996
    %v2007 = vadd.f32 %v1987, %v1997
    %v2008 = vadd.f32 %v1988, %v1998
    %v2009 = vadd.f32 %v1989, %v1999
    %v2010 = vadd.f32 %v1990, %v2000
    %v2011 = vadd.f32 %v1991, %v2001
    %v2012 = vadd.f32 %v1992, %v2002
    %v2013 = vadd.f32 %v1993, %v2003
    %v2014 = vmax.f32 %v1934, %v2004
    %v2015 = vmax.f32 %v1935, %v2005
    %v2016 = vmax.f32 %v1936, %v2006
    %v2017 = vmax.f32 %v1937, %v2007
    %v2018 = vmax.f32 %v1938, %v2008
    %v2019 = vmax.f32 %v1939, %v2009
    %v2020 = vmax.f32 %v1940, %v2010
    %v2021 = vmax.f32 %v1941, %v2011
    %v2022 = vmax.f32 %v1942, %v2012
    %v2023 = vmax.f32 %v1943, %v2013
    %v2024 = vmul.f32 %v106, %v1870
    %v2025 = vmul.f32 %v107, %v1870
    %v2026 = vmul.f32 %v108, %v1870
    %v2027 = vmul.f32 %v109, %v1870
    %v2028 = vmul.f32 %v110, %v1870
    %v2029 = vmul.f32 %v111, %v1870
    %v2030 = vmul.f32 %v112, %v1870
    %v2031 = vmul.f32 %v113, %v1870
    %v2032 = vmul.f32 %v114, %v1870
    %v2033 = vmul.f32 %v115, %v1870
    %v2034 = vmul.f32 %v269, %v1881
    %v2035 = vmul.f32 %v268, %v1881
    %v2036 = vmul.f32 %v267, %v1881
    %v2037 = vmul.f32 %v266, %v1881
    %v2038 = vmul.f32 %v265, %v1881
    %v2039 = vmul.f32 %v264, %v1881
    %v2040 = vmul.f32 %v263, %v1881
    %v2041 = vmul.f32 %v262, %v1881
    %v2042 = vmul.f32 %v261, %v1881
    %v2043 = vmul.f32 %v270, %v1881
    %v2044 = vadd.f32 %v2024, %v2034
    %v2045 = vadd.f32 %v2025, %v2035
    %v2046 = vadd.f32 %v2026, %v2036
    %v2047 = vadd.f32 %v2027, %v2037
    %v2048 = vadd.f32 %v2028, %v2038
    %v2049 = vadd.f32 %v2029, %v2039
    %v2050 = vadd.f32 %v2030, %v2040
    %v2051 = vadd.f32 %v2031, %v2041
    %v2052 = vadd.f32 %v2032, %v2042
    %v2053 = vadd.f32 %v2033, %v2043
    %v2054 = vmul.f32 %v289, %v1902
    %v2055 = vmul.f32 %v288, %v1902
    %v2056 = vmul.f32 %v287, %v1902
    %v2057 = vmul.f32 %v286, %v1902
    %v2058 = vmul.f32 %v285, %v1902
    %v2059 = vmul.f32 %v284, %v1902
    %v2060 = vmul.f32 %v283, %v1902
    %v2061 = vmul.f32 %v282, %v1902
    %v2062 = vmul.f32 %v281, %v1902
    %v2063 = vmul.f32 %v290, %v1902
    %v2064 = vadd.f32 %v2044, %v2054
    %v2065 = vadd.f32 %v2045, %v2055
    %v2066 = vadd.f32 %v2046, %v2056
    %v2067 = vadd.f32 %v2047, %v2057
    %v2068 = vadd.f32 %v2048, %v2058
    %v2069 = vadd.f32 %v2049, %v2059
    %v2070 = vadd.f32 %v2050, %v2060
    %v2071 = vadd.f32 %v2051, %v2061
    %v2072 = vadd.f32 %v2052, %v2062
    %v2073 = vadd.f32 %v2053, %v2063
    %v2074 = vmul.f32 %v309, %v1923
    %v2075 = vmul.f32 %v308, %v1923
    %v2076 = vmul.f32 %v307, %v1923
    %v2077 = vmul.f32 %v306, %v1923
    %v2078 = vmul.f32 %v305, %v1923
    %v2079 = vmul.f32 %v304, %v1923
    %v2080 = vmul.f32 %v303, %v1923
    %v2081 = vmul.f32 %v302, %v1923
    %v2082 = vmul.f32 %v301, %v1923
    %v2083 = vmul.f32 %v310, %v1923
    %v2084 = vadd.f32 %v2064, %v2074
    %v2085 = vadd.f32 %v2065, %v2075
    %v2086 = vadd.f32 %v2066, %v2076
    %v2087 = vadd.f32 %v2067, %v2077
    %v2088 = vadd.f32 %v2068, %v2078
    %v2089 = vadd.f32 %v2069, %v2079
    %v2090 = vadd.f32 %v2070, %v2080
    %v2091 = vadd.f32 %v2071, %v2081
    %v2092 = vadd.f32 %v2072, %v2082
    %v2093 = vadd.f32 %v2073, %v2083
    %v2094 = vmax.f32 %v2014, %v2084
    %v2095 = vmax.f32 %v2015, %v2085
    %v2096 = vmax.f32 %v2016, %v2086
    %v2097 = vmax.f32 %v2017, %v2087
    %v2098 = vmax.f32 %v2018, %v2088
    %v2099 = vmax.f32 %v2019, %v2089
    %v2100 = vmax.f32 %v2020, %v2090
    %v2101 = vmax.f32 %v2021, %v2091
    %v2102 = vmax.f32 %v2022, %v2092
    %v2103 = vmax.f32 %v2023, %v2093
    %v2104 = vmul.f32 %v116, %v1870
    %v2105 = vmul.f32 %v117, %v1870
    %v2106 = vmul.f32 %v118, %v1870
    %v2107 = vmul.f32 %v119, %v1870
    %v2108 = vmul.f32 %v120, %v1870
    %v2109 = vmul.f32 %v121, %v1870
    %v2110 = vmul.f32 %v122, %v1870
    %v2111 = vmul.f32 %v123, %v1870
    %v2112 = vmul.f32 %v124, %v1870
    %v2113 = vmul.f32 %v125, %v1870
    %v2114 = vmul.f32 %v329, %v1881
    %v2115 = vmul.f32 %v328, %v1881
    %v2116 = vmul.f32 %v327, %v1881
    %v2117 = vmul.f32 %v326, %v1881
    %v2118 = vmul.f32 %v325, %v1881
    %v2119 = vmul.f32 %v324, %v1881
    %v2120 = vmul.f32 %v323, %v1881
    %v2121 = vmul.f32 %v322, %v1881
    %v2122 = vmul.f32 %v321, %v1881
    %v2123 = vmul.f32 %v330, %v1881
    %v2124 = vadd.f32 %v2104, %v2114
    %v2125 = vadd.f32 %v2105, %v2115
    %v2126 = vadd.f32 %v2106, %v2116
    %v2127 = vadd.f32 %v2107, %v2117
    %v2128 = vadd.f32 %v2108, %v2118
    %v2129 = vadd.f32 %v2109, %v2119
    %v2130 = vadd.f32 %v2110, %v2120
    %v2131 = vadd.f32 %v2111, %v2121
    %v2132 = vadd.f32 %v2112, %v2122
    %v2133 = vadd.f32 %v2113, %v2123
    %v2134 = vmul.f32 %v349, %v1902
    %v2135 = vmul.f32 %v348, %v1902
    %v2136 = vmul.f32 %v347, %v1902
    %v2137 = vmul.f32 %v346, %v1902
    %v2138 = vmul.f32 %v345, %v1902
    %v2139 = vmul.f32 %v344, %v1902
    %v2140 = vmul.f32 %v343, %v1902
    %v2141 = vmul.f32 %v342, %v1902
    %v2142 = vmul.f32 %v341, %v1902
    %v2143 = vmul.f32 %v350, %v1902
    %v2144 = vadd.f32 %v2124, %v2134
    %v2145 = vadd.f32 %v2125, %v2135
    %v2146 = vadd.f32 %v2126, %v2136
    %v2147 = vadd.f32 %v2127, %v2137
    %v2148 = vadd.f32 %v2128, %v2138
    %v2149 = vadd.f32 %v2129, %v2139
    %v2150 = vadd.f32 %v2130, %v2140
    %v2151 = vadd.f32 %v2131, %v2141
    %v2152 = vadd.f32 %v2132, %v2142
    %v2153 = vadd.f32 %v2133, %v2143
    %v2154 = vmul.f32 %v369, %v1923
    %v2155 = vmul.f32 %v368, %v1923
    %v2156 = vmul.f32 %v367, %v1923
    %v2157 = vmul.f32 %v366, %v1923
    %v2158 = vmul.f32 %v365, %v1923
    %v2159 = vmul.f32 %v364, %v1923
    %v2160 = vmul.f32 %v363, %v1923
    %v2161 = vmul.f32 %v362, %v1923
    %v2162 = vmul.f32 %v361, %v1923
    %v2163 = vmul.f32 %v370, %v1923
    %v2164 = vadd.f32 %v2144, %v2154
    %v2165 = vadd.f32 %v2145, %v2155
    %v2166 = vadd.f32 %v2146, %v2156
    %v2167 = vadd.f32 %v2147, %v2157
    %v2168 = vadd.f32 %v2148, %v2158
    %v2169 = vadd.f32 %v2149, %v2159
    %v2170 = vadd.f32 %v2150, %v2160
    %v2171 = vadd.f32 %v2151, %v2161
    %v2172 = vadd.f32 %v2152, %v2162
    %v2173 = vadd.f32 %v2153, %v2163
    %v2174 = vmax.f32 %v2094, %v2164
    %v2175 = vmax.f32 %v2095, %v2165
    %v2176 = vmax.f32 %v2096, %v2166
    %v2177 = vmax.f32 %v2097, %v2167
    %v2178 = vmax.f32 %v2098, %v2168
    %v2179 = vmax.f32 %v2099, %v2169
    %v2180 = vmax.f32 %v2100, %v2170
    %v2181 = vmax.f32 %v2101, %v2171
    %v2182 = vmax.f32 %v2102, %v2172
    %v2183 = vmax.f32 %v2103, %v2173
    %v2184 = vrot.slane %v2174, 1
    %v2185 = vrot.slane %v2175, 1
    %v2186 = vrot.slane %v2176, 1
    %v2187 = vrot.slane %v2177, 1
    %v2188 = vrot.slane %v2178, 1
    %v2189 = vrot.slane %v2179, 1
    %v2190 = vrot.slane %v2180, 1
    %v2191 = vrot.slane %v2181, 1
    %v2192 = vrot.slane %v2182, 1
    %v2193 = vrot.slane %v2183, 1
    %v2194 = vsel %vm138, %v2192, %v2193
    %v2195 = vsel %vm138, %v2191, %v2192
    %v2196 = vsel %vm138, %v2190, %v2191
    %v2197 = vsel %vm138, %v2189, %v2190
    %v2198 = vsel %vm138, %v2188, %v2189
    %v2199 = vsel %vm138, %v2187, %v2188
    %v2200 = vsel %vm138, %v2186, %v2187
    %v2201 = vsel %vm138, %v2185, %v2186
    %v2202 = vsel %vm138, %v2184, %v2185
    %v2203 = vsel %vm138, %v2193, %v2184
    %v2204 = vmax.f32 %v2174, %v2202
    %v2205 = vmax.f32 %v2175, %v2201
    %v2206 = vmax.f32 %v2176, %v2200
    %v2207 = vmax.f32 %v2177, %v2199
    %v2208 = vmax.f32 %v2178, %v2198
    %v2209 = vmax.f32 %v2179, %v2197
    %v2210 = vmax.f32 %v2180, %v2196
    %v2211 = vmax.f32 %v2181, %v2195
    %v2212 = vmax.f32 %v2182, %v2194
    %v2213 = vmax.f32 %v2183, %v2203
    %v2214 = vrot.slane %v2174, 2
    %v2215 = vrot.slane %v2175, 2
    %v2216 = vrot.slane %v2176, 2
    %v2217 = vrot.slane %v2177, 2
    %v2218 = vrot.slane %v2178, 2
    %v2219 = vrot.slane %v2179, 2
    %v2220 = vrot.slane %v2180, 2
    %v2221 = vrot.slane %v2181, 2
    %v2222 = vrot.slane %v2182, 2
    %v2223 = vrot.slane %v2183, 2
    %v2224 = vsel %vm159, %v2222, %v2223
    %v2225 = vsel %vm159, %v2221, %v2222
    %v2226 = vsel %vm159, %v2220, %v2221
    %v2227 = vsel %vm159, %v2219, %v2220
    %v2228 = vsel %vm159, %v2218, %v2219
    %v2229 = vsel %vm159, %v2217, %v2218
    %v2230 = vsel %vm159, %v2216, %v2217
    %v2231 = vsel %vm159, %v2215, %v2216
    %v2232 = vsel %vm159, %v2214, %v2215
    %v2233 = vsel %vm159, %v2223, %v2214
    %v2234 = vmax.f32 %v2204, %v2232
    %v2235 = vmax.f32 %v2205, %v2231
    %v2236 = vmax.f32 %v2206, %v2230
    %v2237 = vmax.f32 %v2207, %v2229
    %v2238 = vmax.f32 %v2208, %v2228
    %v2239 = vmax.f32 %v2209, %v2227
    %v2240 = vmax.f32 %v2210, %v2226
    %v2241 = vmax.f32 %v2211, %v2225
    %v2242 = vmax.f32 %v2212, %v2224
    %v2243 = vmax.f32 %v2213, %v2233
    %v2244 = vrot.slane %v2174, 3
    %v2245 = vrot.slane %v2175, 3
    %v2246 = vrot.slane %v2176, 3
    %v2247 = vrot.slane %v2177, 3
    %v2248 = vrot.slane %v2178, 3
    %v2249 = vrot.slane %v2179, 3
    %v2250 = vrot.slane %v2180, 3
    %v2251 = vrot.slane %v2181, 3
    %v2252 = vrot.slane %v2182, 3
    %v2253 = vrot.slane %v2183, 3
    %v2254 = vsel %vm180, %v2252, %v2253
    %v2255 = vsel %vm180, %v2251, %v2252
    %v2256 = vsel %vm180, %v2250, %v2251
    %v2257 = vsel %vm180, %v2249, %v2250
    %v2258 = vsel %vm180, %v2248, %v2249
    %v2259 = vsel %vm180, %v2247, %v2248
    %v2260 = vsel %vm180, %v2246, %v2247
    %v2261 = vsel %vm180, %v2245, %v2246
    %v2262 = vsel %vm180, %v2244, %v2245
    %v2263 = vsel %vm180, %v2253, %v2244
    %v2264 = vmax.f32 %v2234, %v2262
    %v2265 = vmax.f32 %v2235, %v2261
    %v2266 = vmax.f32 %v2236, %v2260
    %v2267 = vmax.f32 %v2237, %v2259
    %v2268 = vmax.f32 %v2238, %v2258
    %v2269 = vmax.f32 %v2239, %v2257
    %v2270 = vmax.f32 %v2240, %v2256
    %v2271 = vmax.f32 %v2241, %v2255
    %v2272 = vmax.f32 %v2242, %v2254
    %v2273 = vmax.f32 %v2243, %v2263
    %s2274 = sld [smem:[#allocation5 + $0x3]]
    %s2275 = ssub.f32 0.0, %s2274
    %v2276 = vstv %s2275
    %v2277 = vmax.f32 %v2264, %v2276
    %v2278 = vmax.f32 %v2265, %v2276
    %v2279 = vmax.f32 %v2266, %v2276
    %v2280 = vmax.f32 %v2267, %v2276
    %v2281 = vmax.f32 %v2268, %v2276
    %v2282 = vmax.f32 %v2269, %v2276
    %v2283 = vmax.f32 %v2270, %v2276
    %v2284 = vmax.f32 %v2271, %v2276
    %v2285 = vmax.f32 %v2272, %v2276
    %v2286 = vmax.f32 %v2273, %v2276
    %s2287 = scalar_lea.vmem %s4, 240
    %v2288 = vld [vmem:[%s2287] sm:$0xff]
    %v2289 = vld [vmem:[%s2287 + $0x8] sm:$0xff]
    %v2290 = vld [vmem:[%s2287 + $0x10] sm:$0xff]
    %v2291 = vld [vmem:[%s2287 + $0x18] sm:$0xff]
    %v2292 = vld [vmem:[%s2287 + $0x20] sm:$0xff]
    %v2293 = vld [vmem:[%s2287 + $0x28] sm:$0xff]
    %v2294 = vld [vmem:[%s2287 + $0x30] sm:$0xff]
    %v2295 = vld [vmem:[%s2287 + $0x38] sm:$0xff]
    %v2296 = vld [vmem:[%s2287 + $0x40] sm:$0xff]
    %v2297 = vld [vmem:[%s2287 + $0x48] sm:$0xff]
    %2299 = vset.pattern.permute.xlu0 0
    %2300 = vperm.xlu0 %2299, %v2288
    %v2301 = vpop.permute.xlu0 %2300
    %2304 = vset.pattern.permute.xlu0 0
    %2305 = vperm.xlu0 %2304, %v2289
    %v2306 = vpop.permute.xlu0 %2305
    %2309 = vset.pattern.permute.xlu0 0
    %2310 = vperm.xlu0 %2309, %v2290
    %v2311 = vpop.permute.xlu0 %2310
    %2314 = vset.pattern.permute.xlu0 0
    %2315 = vperm.xlu0 %2314, %v2291
    %v2316 = vpop.permute.xlu0 %2315
    %2319 = vset.pattern.permute.xlu0 0
    %2320 = vperm.xlu0 %2319, %v2292
    %v2321 = vpop.permute.xlu0 %2320
    %2324 = vset.pattern.permute.xlu0 0
    %2325 = vperm.xlu0 %2324, %v2293
    %v2326 = vpop.permute.xlu0 %2325
    %2329 = vset.pattern.permute.xlu0 0
    %2330 = vperm.xlu0 %2329, %v2294
    %v2331 = vpop.permute.xlu0 %2330
    %2334 = vset.pattern.permute.xlu0 0
    %2335 = vperm.xlu0 %2334, %v2295
    %v2336 = vpop.permute.xlu0 %2335
    %2339 = vset.pattern.permute.xlu0 0
    %2340 = vperm.xlu0 %2339, %v2296
    %v2341 = vpop.permute.xlu0 %2340
    %2344 = vset.pattern.permute.xlu0 0
    %2345 = vperm.xlu0 %2344, %v2297
    %v2346 = vpop.permute.xlu0 %2345
    %v2348 = vmul.f32 %v2277, %v2301
    %v2349 = vmul.f32 %v2278, %v2306
    %v2350 = vmul.f32 %v2279, %v2311
    %v2351 = vmul.f32 %v2280, %v2316
    %v2352 = vmul.f32 %v2281, %v2321
    %v2353 = vmul.f32 %v2282, %v2326
    %v2354 = vmul.f32 %v2283, %v2331
    %v2355 = vmul.f32 %v2284, %v2336
    %v2356 = vmul.f32 %v2285, %v2341
    %v2357 = vmul.f32 %v2286, %v2346
    %v2358 = vadd.f32 %v1856, %v2348
    %v2359 = vadd.f32 %v1857, %v2349
    %v2360 = vadd.f32 %v1858, %v2350
    %v2361 = vadd.f32 %v1859, %v2351
    %v2362 = vadd.f32 %v1860, %v2352
    %v2363 = vadd.f32 %v1861, %v2353
    %v2364 = vadd.f32 %v1862, %v2354
    %v2365 = vadd.f32 %v1863, %v2355
    %v2366 = vadd.f32 %v1864, %v2356
    %v2367 = vadd.f32 %v1865, %v2357
    %v2368 = vadd.f32 %v2358, %v2359
    %v2369 = vadd.f32 %v2368, %v2360
    %v2370 = vadd.f32 %v2369, %v2361
    %v2371 = vadd.f32 %v2370, %v2362
    %v2372 = vadd.f32 %v2371, %v2363
    %v2373 = vadd.f32 %v2372, %v2364
    %v2374 = vadd.f32 %v2373, %v2365
    %v2375 = vadd.f32 %v2374, %v2366
    %v2376 = vadd.f32 %v2375, %v2367
    %v2377 = vrot.slane %v2376, 4
    %v2378 = vadd.f32 %v2376, %v2377
    %v2379 = vrot.slane %v2378, 2
    %v2380 = vadd.f32 %v2378, %v2379
    %v2381 = vrot.slane %v2380, 1
    %v2382 = vadd.f32 %v2380, %v2381
    %s2383 = sld [smem:[#allocation2]]
    %v2384 = vstv %s2383
    %v2385 = vadd.f32 %v2382, %v2384
    %v2386 = vand.u32 2147483647, %v2385
    %v2387 = vsub.f32 0.0, %v2386
    %v2388 = vmul.f32 %v2387, 1.442695
    %v2389 = vpow.pop %v2388
    %vm2390 = vcmp.ge.f32.partialorder %v2385, 0.0
    %v2391 = vadd.f32 %v2389, 1.0
    %v2392 = vrcp.pop %v2391
    %v2393 = vmul.f32 1.0, %v2392
    %v2394 = vmul.f32 %v2389, %v2392
    %v2395 = vsel %vm2390, %v2393, %v2394
    %2396 = vst [vmem:[%s5] sm:$0x1] %v2395
    // Predicated region
    $region30: #{_homo_frac_pre_impl.1} parent=1 // pred_check
      _
    $region31: #{_homo_frac_pre_impl.1} parent=1 // pred_check_branch
      %2398 = sbr.rel (0) target = $region33
    $region32: #{_homo_frac_pre_impl.1} parent=1 // pred_region
      _
    $region33: #{_homo_frac_pre_impl.1} parent=1 // pred_fallthru
      _
    // Predicated region
    $region34: #{_homo_frac_pre_impl.1} parent=1 // pred_check
      _
    $region35: #{_homo_frac_pre_impl.1} parent=1 // pred_check_branch
      %2400 = sbr.rel (0) target = $region37
    $region36: #{_homo_frac_pre_impl.1} parent=1 // pred_region
      _
    $region37: #{_homo_frac_pre_impl.1} parent=1 // pred_fallthru
      _
    %2401 = vsyncpa [#allocation4], 1
    %2402 = vsyncpa [#allocation6], 1

</llo_original>
